<compile_context>
chip_gen: v7x
topology: tpu7x:2x2x1
jax: 0.10.0
libtpu: 0.0.40
codegen_flags: <defaults>
</compile_context>

<pallas_src>
import functools
import math

import jax
import jax.numpy as jnp
from jax.experimental import pallas as pl
from jax.experimental.pallas import tpu as pltpu


def _ngram_feat_kernel(x_ref, w_ref, b_ref, o_ref, col_ref, *,
                       kz, l_out, l_pad, ebd, d_tile):
    """Fused conv1d(valid) + bias + ReLU + max-over-time for D_TILE docs.

    x_ref:   [d_tile, dlen, ebd]        embedded docs (NLC layout)
    w_ref:   [kz*ebd, filter_num]       im2col-folded conv weight
    b_ref:   [1, filter_num]            conv bias
    o_ref:   [d_tile, filter_num]       per-doc pooled features
    col_ref: [d_tile*l_pad, kz*ebd]     VMEM scratch (im2col slab)
    """
    # Build the im2col slab: col[d*l_pad + t, k*ebd + c] = x[d, t + k, c].
    # kz and d_tile are small & static -> fully unrolled copies.
    for d in range(d_tile):
        for k in range(kz):
            col_ref[pl.ds(d * l_pad, l_out), k * ebd:(k + 1) * ebd] = (
                x_ref[d, pl.ds(k, l_out), :])

    # One big MXU matmul: [d_tile*l_pad, kz*ebd] @ [kz*ebd, filter_num].
    res = jnp.dot(col_ref[...], w_ref[...], preferred_element_type=jnp.float32)
    res = jnp.maximum(res + b_ref[...], 0.0)          # bias + ReLU

    fnum = res.shape[-1]
    res = res.reshape(d_tile, l_pad, fnum)            # l_pad % 8 == 0 -> no relayout
    if l_pad != l_out:
        # Rows [l_out, l_pad) come from unwritten scratch; mask them out so the
        # max-over-time only sees real conv outputs (all real values are >= 0
        # after ReLU, so 0.0 is a safe neutral element).
        pos = jax.lax.broadcasted_iota(jnp.int32, res.shape, 1)
        res = jnp.where(pos < l_out, res, 0.0)

    o_ref[...] = jnp.max(res, axis=1).astype(o_ref.dtype)   # [d_tile, filter_num]


def ngram_feat_forward(text, emb_table, conv_weight, conv_bias, *, d_tile=8):
    """NgramFeat_old.forward.

    text:        [bz, dnum, dlen]   int32 token ids
    emb_table:   [vocab, ebd]
    conv_weight: [filter_num, ebd, kz]   (PyTorch Conv1d weight layout)
    conv_bias:   [filter_num]
    returns      [bz, dnum, filter_num]
    """
    bz, dnum, dlen = text.shape
    _, ebd = emb_table.shape
    fnum, _, kz = conv_weight.shape
    l_out = dlen - kz + 1
    l_pad = ((l_out + 7) // 8) * 8          # keep sublane tiles aligned
    n_docs = bz * dnum
    n_pad = ((n_docs + d_tile - 1) // d_tile) * d_tile

    # TODO(synk): embedding gather stays an XLA op; an in-kernel version needs a
    # per-token manual DMA gather (vocab table does not fit VMEM in general).
    x = jnp.take(emb_table, text.reshape(n_docs, dlen), axis=0)   # [n_docs, dlen, ebd]
    if n_pad != n_docs:
        x = jnp.pad(x, ((0, n_pad - n_docs), (0, 0), (0, 0)))

    # Fold the kz taps into the contraction dim: w2d[(k*ebd + c), f] = w[f, c, k].
    w2d = jnp.transpose(conv_weight, (2, 1, 0)).reshape(kz * ebd, fnum)
    b2d = conv_bias.reshape(1, fnum)

    out = pl.pallas_call(
        functools.partial(_ngram_feat_kernel, kz=kz, l_out=l_out, l_pad=l_pad,
                          ebd=ebd, d_tile=d_tile),
        out_shape=jax.ShapeDtypeStruct((n_pad, fnum), x.dtype),
        grid=(n_pad // d_tile,),
        in_specs=[
            pl.BlockSpec((d_tile, dlen, ebd), lambda i: (i, 0, 0)),
            pl.BlockSpec((kz * ebd, fnum), lambda i: (0, 0)),
            pl.BlockSpec((1, fnum), lambda i: (0, 0)),
        ],
        out_specs=pl.BlockSpec((d_tile, fnum), lambda i: (i, 0)),
        scratch_shapes=[pltpu.VMEM((d_tile * l_pad, kz * ebd), jnp.float32)],
        compiler_params=pltpu.CompilerParams(
            dimension_semantics=("parallel",)),
    )(x, w2d, b2d)

    return out[:n_docs].reshape(bz, dnum, fnum)


class NgramFeatOldPallas:
    """Pallas equivalent of NgramFeat_old (embedding + conv1d + ReLU + max-pool)."""

    def __init__(self, vocab_size, kernel_size, filter_num, embedding_dim,
                 max_doc_num, max_doc_len, padding_idx, key,
                 pretrained_embeddings=None):
        del max_doc_num  # only used for shape checks in the original module
        k_emb, k_w, k_b = jax.random.split(key, 3)
        if pretrained_embeddings is not None:
            emb = jnp.asarray(pretrained_embeddings, jnp.float32)
        else:
            emb = jax.random.normal(k_emb, (vocab_size, embedding_dim), jnp.float32)
        emb = emb.at[padding_idx].set(0.0)   # nn.Embedding(padding_idx=...) zero row
        self.emb_table = emb

        fan_in = embedding_dim * kernel_size
        bound = 1.0 / math.sqrt(fan_in)      # PyTorch Conv1d default init range
        self.conv_w = jax.random.uniform(
            k_w, (filter_num, embedding_dim, kernel_size), jnp.float32, -bound, bound)
        self.conv_b = jax.random.uniform(
            k_b, (filter_num,), jnp.float32, -bound, bound)

        self.kernel_size = kernel_size
        self.filter_num = filter_num
        self.max_doc_len = max_doc_len

    def __call__(self, text):
        return ngram_feat_forward(text, self.emb_table, self.conv_w, self.conv_b)


def _ref_forward(text, emb_table, weight, bias):
    """Plain-JAX reference: embed -> valid conv1d -> ReLU -> max over time."""
    fnum, ebd, kz = weight.shape
    bz, dnum, dlen = text.shape
    x = jnp.take(emb_table, text.reshape(bz * dnum, dlen), axis=0)
    l_out = dlen - kz + 1
    acc = jnp.zeros((bz * dnum, l_out, fnum), jnp.float32)
    for k in range(kz):
        acc = acc + jnp.einsum('ntc,fc->ntf', x[:, k:k + l_out, :], weight[:, :, k],
                               precision=jax.lax.Precision.HIGHEST)
    acc = jnp.maximum(acc + bias[None, None, :], 0.0)
    return acc.max(axis=1).reshape(bz, dnum, fnum)


if __name__ == "__main__":
    key = jax.random.PRNGKey(0)
    k_text, k_mod = jax.random.split(key)

    # Small shapes consistent with the module's forward contract
    # (text: [bz, max_doc_num, max_doc_len]); channel dims kept lane-dense.
    bz, dnum, dlen = 2, 8, 24
    vocab_size, embedding_dim, filter_num, kernel_size = 97, 128, 128, 3

    text = jax.random.randint(k_text, (bz, dnum, dlen), 0, vocab_size, jnp.int32)

    module = NgramFeatOldPallas(vocab_size, kernel_size, filter_num, embedding_dim,
                                max_doc_num=dnum, max_doc_len=dlen,
                                padding_idx=0, key=k_mod)
    out = jax.block_until_ready(module(text))

    assert out.shape == (bz, dnum, filter_num), out.shape

    ref = _ref_forward(text, module.emb_table, module.conv_w, module.conv_b)
    assert jnp.allclose(out, ref, atol=1e-3, rtol=1e-3), "mismatch vs reference"

    print("KERNEL_OK")
</pallas_src>

<mosaic_0001>
module attributes {stable_mosaic.version = 11 : i64} {
  func.func @_ngram_feat_kernel(%arg0: i32, %arg1: memref<8x24x128xf32, #tpu.memory_space<vmem>>, %arg2: memref<384x128xf32, #tpu.memory_space<vmem>>, %arg3: memref<1x128xf32, #tpu.memory_space<vmem>>, %arg4: memref<8x128xf32, #tpu.memory_space<vmem>>, %arg5: memref<192x384xf32, #tpu.memory_space<vmem>>) attributes {dimension_semantics = [#tpu.dimension_semantics<parallel>], iteration_bounds = array<i64: 2>, scalar_prefetch = 0 : i64, scratch_operands = 1 : i64, tpu.core_type = #tpu.core_type<tc>, window_params = [{transform_indices = @transform_0, window_bounds = array<i64: 8, 24, 128>}, {pipeline_mode = #tpu.pipeline_mode<synchronous>, transform_indices = @transform_1, window_bounds = array<i64: 384, 128>}, {pipeline_mode = #tpu.pipeline_mode<synchronous>, transform_indices = @transform_2, window_bounds = array<i64: 1, 128>}, {transform_indices = @transform_3, window_bounds = array<i64: 8, 128>}]} {
    %c0 = arith.constant 0 : index
    %c0_0 = arith.constant 0 : index
    %c0_1 = arith.constant 0 : index
    %0 = vector.load %arg1[%c0, %c0_0, %c0_1] : memref<8x24x128xf32, #tpu.memory_space<vmem>>, vector<1x22x128xf32>
    %1 = vector.shape_cast %0 : vector<1x22x128xf32> to vector<22x128xf32>
    %c0_2 = arith.constant 0 : index
    %c0_3 = arith.constant 0 : index
    %2 = vector.load %arg5[%c0_2, %c0_3] : memref<192x384xf32, #tpu.memory_space<vmem>>, vector<22x128xf32>
    tpu.vector_store %arg5[%c0_2, %c0_3], %1 {strides = array<i32>} : memref<192x384xf32, #tpu.memory_space<vmem>>, vector<22x128xf32>,
    %c0_4 = arith.constant 0 : index
    %c1 = arith.constant 1 : index
    %c0_5 = arith.constant 0 : index
    %3 = vector.load %arg1[%c0_4, %c1, %c0_5] : memref<8x24x128xf32, #tpu.memory_space<vmem>>, vector<1x22x128xf32>
    %4 = vector.shape_cast %3 : vector<1x22x128xf32> to vector<22x128xf32>
    %c0_6 = arith.constant 0 : index
    %c128 = arith.constant 128 : index
    %5 = vector.load %arg5[%c0_6, %c128] : memref<192x384xf32, #tpu.memory_space<vmem>>, vector<22x128xf32>
    tpu.vector_store %arg5[%c0_6, %c128], %4 {strides = array<i32>} : memref<192x384xf32, #tpu.memory_space<vmem>>, vector<22x128xf32>,
    %c0_7 = arith.constant 0 : index
    %c2 = arith.constant 2 : index
    %c0_8 = arith.constant 0 : index
    %6 = vector.load %arg1[%c0_7, %c2, %c0_8] : memref<8x24x128xf32, #tpu.memory_space<vmem>>, vector<1x22x128xf32>
    %7 = vector.shape_cast %6 : vector<1x22x128xf32> to vector<22x128xf32>
    %c0_9 = arith.constant 0 : index
    %c256 = arith.constant 256 : index
    %8 = vector.load %arg5[%c0_9, %c256] : memref<192x384xf32, #tpu.memory_space<vmem>>, vector<22x128xf32>
    tpu.vector_store %arg5[%c0_9, %c256], %7 {strides = array<i32>} : memref<192x384xf32, #tpu.memory_space<vmem>>, vector<22x128xf32>,
    %c1_10 = arith.constant 1 : index
    %c0_11 = arith.constant 0 : index
    %c0_12 = arith.constant 0 : index
    %9 = vector.load %arg1[%c1_10, %c0_11, %c0_12] : memref<8x24x128xf32, #tpu.memory_space<vmem>>, vector<1x22x128xf32>
    %10 = vector.shape_cast %9 : vector<1x22x128xf32> to vector<22x128xf32>
    %c24 = arith.constant 24 : index
    %c0_13 = arith.constant 0 : index
    %11 = vector.load %arg5[%c24, %c0_13] : memref<192x384xf32, #tpu.memory_space<vmem>>, vector<22x128xf32>
    tpu.vector_store %arg5[%c24, %c0_13], %10 {strides = array<i32>} : memref<192x384xf32, #tpu.memory_space<vmem>>, vector<22x128xf32>,
    %c1_14 = arith.constant 1 : index
    %c1_15 = arith.constant 1 : index
    %c0_16 = arith.constant 0 : index
    %12 = vector.load %arg1[%c1_14, %c1_15, %c0_16] : memref<8x24x128xf32, #tpu.memory_space<vmem>>, vector<1x22x128xf32>
    %13 = vector.shape_cast %12 : vector<1x22x128xf32> to vector<22x128xf32>
    %c24_17 = arith.constant 24 : index
    %c128_18 = arith.constant 128 : index
    %14 = vector.load %arg5[%c24_17, %c128_18] : memref<192x384xf32, #tpu.memory_space<vmem>>, vector<22x128xf32>
    tpu.vector_store %arg5[%c24_17, %c128_18], %13 {strides = array<i32>} : memref<192x384xf32, #tpu.memory_space<vmem>>, vector<22x128xf32>,
    %c1_19 = arith.constant 1 : index
    %c2_20 = arith.constant 2 : index
    %c0_21 = arith.constant 0 : index
    %15 = vector.load %arg1[%c1_19, %c2_20, %c0_21] : memref<8x24x128xf32, #tpu.memory_space<vmem>>, vector<1x22x128xf32>
    %16 = vector.shape_cast %15 : vector<1x22x128xf32> to vector<22x128xf32>
    %c24_22 = arith.constant 24 : index
    %c256_23 = arith.constant 256 : index
    %17 = vector.load %arg5[%c24_22, %c256_23] : memref<192x384xf32, #tpu.memory_space<vmem>>, vector<22x128xf32>
    tpu.vector_store %arg5[%c24_22, %c256_23], %16 {strides = array<i32>} : memref<192x384xf32, #tpu.memory_space<vmem>>, vector<22x128xf32>,
    %c2_24 = arith.constant 2 : index
    %c0_25 = arith.constant 0 : index
    %c0_26 = arith.constant 0 : index
    %18 = vector.load %arg1[%c2_24, %c0_25, %c0_26] : memref<8x24x128xf32, #tpu.memory_space<vmem>>, vector<1x22x128xf32>
    %19 = vector.shape_cast %18 : vector<1x22x128xf32> to vector<22x128xf32>
    %c48 = arith.constant 48 : index
    %c0_27 = arith.constant 0 : index
    %20 = vector.load %arg5[%c48, %c0_27] : memref<192x384xf32, #tpu.memory_space<vmem>>, vector<22x128xf32>
    tpu.vector_store %arg5[%c48, %c0_27], %19 {strides = array<i32>} : memref<192x384xf32, #tpu.memory_space<vmem>>, vector<22x128xf32>,
    %c2_28 = arith.constant 2 : index
    %c1_29 = arith.constant 1 : index
    %c0_30 = arith.constant 0 : index
    %21 = vector.load %arg1[%c2_28, %c1_29, %c0_30] : memref<8x24x128xf32, #tpu.memory_space<vmem>>, vector<1x22x128xf32>
    %22 = vector.shape_cast %21 : vector<1x22x128xf32> to vector<22x128xf32>
    %c48_31 = arith.constant 48 : index
    %c128_32 = arith.constant 128 : index
    %23 = vector.load %arg5[%c48_31, %c128_32] : memref<192x384xf32, #tpu.memory_space<vmem>>, vector<22x128xf32>
    tpu.vector_store %arg5[%c48_31, %c128_32], %22 {strides = array<i32>} : memref<192x384xf32, #tpu.memory_space<vmem>>, vector<22x128xf32>,
    %c2_33 = arith.constant 2 : index
    %c2_34 = arith.constant 2 : index
    %c0_35 = arith.constant 0 : index
    %24 = vector.load %arg1[%c2_33, %c2_34, %c0_35] : memref<8x24x128xf32, #tpu.memory_space<vmem>>, vector<1x22x128xf32>
    %25 = vector.shape_cast %24 : vector<1x22x128xf32> to vector<22x128xf32>
    %c48_36 = arith.constant 48 : index
    %c256_37 = arith.constant 256 : index
    %26 = vector.load %arg5[%c48_36, %c256_37] : memref<192x384xf32, #tpu.memory_space<vmem>>, vector<22x128xf32>
    tpu.vector_store %arg5[%c48_36, %c256_37], %25 {strides = array<i32>} : memref<192x384xf32, #tpu.memory_space<vmem>>, vector<22x128xf32>,
    %c3 = arith.constant 3 : index
    %c0_38 = arith.constant 0 : index
    %c0_39 = arith.constant 0 : index
    %27 = vector.load %arg1[%c3, %c0_38, %c0_39] : memref<8x24x128xf32, #tpu.memory_space<vmem>>, vector<1x22x128xf32>
    %28 = vector.shape_cast %27 : vector<1x22x128xf32> to vector<22x128xf32>
    %c72 = arith.constant 72 : index
    %c0_40 = arith.constant 0 : index
    %29 = vector.load %arg5[%c72, %c0_40] : memref<192x384xf32, #tpu.memory_space<vmem>>, vector<22x128xf32>
    tpu.vector_store %arg5[%c72, %c0_40], %28 {strides = array<i32>} : memref<192x384xf32, #tpu.memory_space<vmem>>, vector<22x128xf32>,
    %c3_41 = arith.constant 3 : index
    %c1_42 = arith.constant 1 : index
    %c0_43 = arith.constant 0 : index
    %30 = vector.load %arg1[%c3_41, %c1_42, %c0_43] : memref<8x24x128xf32, #tpu.memory_space<vmem>>, vector<1x22x128xf32>
    %31 = vector.shape_cast %30 : vector<1x22x128xf32> to vector<22x128xf32>
    %c72_44 = arith.constant 72 : index
    %c128_45 = arith.constant 128 : index
    %32 = vector.load %arg5[%c72_44, %c128_45] : memref<192x384xf32, #tpu.memory_space<vmem>>, vector<22x128xf32>
    tpu.vector_store %arg5[%c72_44, %c128_45], %31 {strides = array<i32>} : memref<192x384xf32, #tpu.memory_space<vmem>>, vector<22x128xf32>,
    %c3_46 = arith.constant 3 : index
    %c2_47 = arith.constant 2 : index
    %c0_48 = arith.constant 0 : index
    %33 = vector.load %arg1[%c3_46, %c2_47, %c0_48] : memref<8x24x128xf32, #tpu.memory_space<vmem>>, vector<1x22x128xf32>
    %34 = vector.shape_cast %33 : vector<1x22x128xf32> to vector<22x128xf32>
    %c72_49 = arith.constant 72 : index
    %c256_50 = arith.constant 256 : index
    %35 = vector.load %arg5[%c72_49, %c256_50] : memref<192x384xf32, #tpu.memory_space<vmem>>, vector<22x128xf32>
    tpu.vector_store %arg5[%c72_49, %c256_50], %34 {strides = array<i32>} : memref<192x384xf32, #tpu.memory_space<vmem>>, vector<22x128xf32>,
    %c4 = arith.constant 4 : index
    %c0_51 = arith.constant 0 : index
    %c0_52 = arith.constant 0 : index
    %36 = vector.load %arg1[%c4, %c0_51, %c0_52] : memref<8x24x128xf32, #tpu.memory_space<vmem>>, vector<1x22x128xf32>
    %37 = vector.shape_cast %36 : vector<1x22x128xf32> to vector<22x128xf32>
    %c96 = arith.constant 96 : index
    %c0_53 = arith.constant 0 : index
    %38 = vector.load %arg5[%c96, %c0_53] : memref<192x384xf32, #tpu.memory_space<vmem>>, vector<22x128xf32>
    tpu.vector_store %arg5[%c96, %c0_53], %37 {strides = array<i32>} : memref<192x384xf32, #tpu.memory_space<vmem>>, vector<22x128xf32>,
    %c4_54 = arith.constant 4 : index
    %c1_55 = arith.constant 1 : index
    %c0_56 = arith.constant 0 : index
    %39 = vector.load %arg1[%c4_54, %c1_55, %c0_56] : memref<8x24x128xf32, #tpu.memory_space<vmem>>, vector<1x22x128xf32>
    %40 = vector.shape_cast %39 : vector<1x22x128xf32> to vector<22x128xf32>
    %c96_57 = arith.constant 96 : index
    %c128_58 = arith.constant 128 : index
    %41 = vector.load %arg5[%c96_57, %c128_58] : memref<192x384xf32, #tpu.memory_space<vmem>>, vector<22x128xf32>
    tpu.vector_store %arg5[%c96_57, %c128_58], %40 {strides = array<i32>} : memref<192x384xf32, #tpu.memory_space<vmem>>, vector<22x128xf32>,
    %c4_59 = arith.constant 4 : index
    %c2_60 = arith.constant 2 : index
    %c0_61 = arith.constant 0 : index
    %42 = vector.load %arg1[%c4_59, %c2_60, %c0_61] : memref<8x24x128xf32, #tpu.memory_space<vmem>>, vector<1x22x128xf32>
    %43 = vector.shape_cast %42 : vector<1x22x128xf32> to vector<22x128xf32>
    %c96_62 = arith.constant 96 : index
    %c256_63 = arith.constant 256 : index
    %44 = vector.load %arg5[%c96_62, %c256_63] : memref<192x384xf32, #tpu.memory_space<vmem>>, vector<22x128xf32>
    tpu.vector_store %arg5[%c96_62, %c256_63], %43 {strides = array<i32>} : memref<192x384xf32, #tpu.memory_space<vmem>>, vector<22x128xf32>,
    %c5 = arith.constant 5 : index
    %c0_64 = arith.constant 0 : index
    %c0_65 = arith.constant 0 : index
    %45 = vector.load %arg1[%c5, %c0_64, %c0_65] : memref<8x24x128xf32, #tpu.memory_space<vmem>>, vector<1x22x128xf32>
    %46 = vector.shape_cast %45 : vector<1x22x128xf32> to vector<22x128xf32>
    %c120 = arith.constant 120 : index
    %c0_66 = arith.constant 0 : index
    %47 = vector.load %arg5[%c120, %c0_66] : memref<192x384xf32, #tpu.memory_space<vmem>>, vector<22x128xf32>
    tpu.vector_store %arg5[%c120, %c0_66], %46 {strides = array<i32>} : memref<192x384xf32, #tpu.memory_space<vmem>>, vector<22x128xf32>,
    %c5_67 = arith.constant 5 : index
    %c1_68 = arith.constant 1 : index
    %c0_69 = arith.constant 0 : index
    %48 = vector.load %arg1[%c5_67, %c1_68, %c0_69] : memref<8x24x128xf32, #tpu.memory_space<vmem>>, vector<1x22x128xf32>
    %49 = vector.shape_cast %48 : vector<1x22x128xf32> to vector<22x128xf32>
    %c120_70 = arith.constant 120 : index
    %c128_71 = arith.constant 128 : index
    %50 = vector.load %arg5[%c120_70, %c128_71] : memref<192x384xf32, #tpu.memory_space<vmem>>, vector<22x128xf32>
    tpu.vector_store %arg5[%c120_70, %c128_71], %49 {strides = array<i32>} : memref<192x384xf32, #tpu.memory_space<vmem>>, vector<22x128xf32>,
    %c5_72 = arith.constant 5 : index
    %c2_73 = arith.constant 2 : index
    %c0_74 = arith.constant 0 : index
    %51 = vector.load %arg1[%c5_72, %c2_73, %c0_74] : memref<8x24x128xf32, #tpu.memory_space<vmem>>, vector<1x22x128xf32>
    %52 = vector.shape_cast %51 : vector<1x22x128xf32> to vector<22x128xf32>
    %c120_75 = arith.constant 120 : index
    %c256_76 = arith.constant 256 : index
    %53 = vector.load %arg5[%c120_75, %c256_76] : memref<192x384xf32, #tpu.memory_space<vmem>>, vector<22x128xf32>
    tpu.vector_store %arg5[%c120_75, %c256_76], %52 {strides = array<i32>} : memref<192x384xf32, #tpu.memory_space<vmem>>, vector<22x128xf32>,
    %c6 = arith.constant 6 : index
    %c0_77 = arith.constant 0 : index
    %c0_78 = arith.constant 0 : index
    %54 = vector.load %arg1[%c6, %c0_77, %c0_78] : memref<8x24x128xf32, #tpu.memory_space<vmem>>, vector<1x22x128xf32>
    %55 = vector.shape_cast %54 : vector<1x22x128xf32> to vector<22x128xf32>
    %c144 = arith.constant 144 : index
    %c0_79 = arith.constant 0 : index
    %56 = vector.load %arg5[%c144, %c0_79] : memref<192x384xf32, #tpu.memory_space<vmem>>, vector<22x128xf32>
    tpu.vector_store %arg5[%c144, %c0_79], %55 {strides = array<i32>} : memref<192x384xf32, #tpu.memory_space<vmem>>, vector<22x128xf32>,
    %c6_80 = arith.constant 6 : index
    %c1_81 = arith.constant 1 : index
    %c0_82 = arith.constant 0 : index
    %57 = vector.load %arg1[%c6_80, %c1_81, %c0_82] : memref<8x24x128xf32, #tpu.memory_space<vmem>>, vector<1x22x128xf32>
    %58 = vector.shape_cast %57 : vector<1x22x128xf32> to vector<22x128xf32>
    %c144_83 = arith.constant 144 : index
    %c128_84 = arith.constant 128 : index
    %59 = vector.load %arg5[%c144_83, %c128_84] : memref<192x384xf32, #tpu.memory_space<vmem>>, vector<22x128xf32>
    tpu.vector_store %arg5[%c144_83, %c128_84], %58 {strides = array<i32>} : memref<192x384xf32, #tpu.memory_space<vmem>>, vector<22x128xf32>,
    %c6_85 = arith.constant 6 : index
    %c2_86 = arith.constant 2 : index
    %c0_87 = arith.constant 0 : index
    %60 = vector.load %arg1[%c6_85, %c2_86, %c0_87] : memref<8x24x128xf32, #tpu.memory_space<vmem>>, vector<1x22x128xf32>
    %61 = vector.shape_cast %60 : vector<1x22x128xf32> to vector<22x128xf32>
    %c144_88 = arith.constant 144 : index
    %c256_89 = arith.constant 256 : index
    %62 = vector.load %arg5[%c144_88, %c256_89] : memref<192x384xf32, #tpu.memory_space<vmem>>, vector<22x128xf32>
    tpu.vector_store %arg5[%c144_88, %c256_89], %61 {strides = array<i32>} : memref<192x384xf32, #tpu.memory_space<vmem>>, vector<22x128xf32>,
    %c7 = arith.constant 7 : index
    %c0_90 = arith.constant 0 : index
    %c0_91 = arith.constant 0 : index
    %63 = vector.load %arg1[%c7, %c0_90, %c0_91] : memref<8x24x128xf32, #tpu.memory_space<vmem>>, vector<1x22x128xf32>
    %64 = vector.shape_cast %63 : vector<1x22x128xf32> to vector<22x128xf32>
    %c168 = arith.constant 168 : index
    %c0_92 = arith.constant 0 : index
    %65 = vector.load %arg5[%c168, %c0_92] : memref<192x384xf32, #tpu.memory_space<vmem>>, vector<22x128xf32>
    tpu.vector_store %arg5[%c168, %c0_92], %64 {strides = array<i32>} : memref<192x384xf32, #tpu.memory_space<vmem>>, vector<22x128xf32>,
    %c7_93 = arith.constant 7 : index
    %c1_94 = arith.constant 1 : index
    %c0_95 = arith.constant 0 : index
    %66 = vector.load %arg1[%c7_93, %c1_94, %c0_95] : memref<8x24x128xf32, #tpu.memory_space<vmem>>, vector<1x22x128xf32>
    %67 = vector.shape_cast %66 : vector<1x22x128xf32> to vector<22x128xf32>
    %c168_96 = arith.constant 168 : index
    %c128_97 = arith.constant 128 : index
    %68 = vector.load %arg5[%c168_96, %c128_97] : memref<192x384xf32, #tpu.memory_space<vmem>>, vector<22x128xf32>
    tpu.vector_store %arg5[%c168_96, %c128_97], %67 {strides = array<i32>} : memref<192x384xf32, #tpu.memory_space<vmem>>, vector<22x128xf32>,
    %c7_98 = arith.constant 7 : index
    %c2_99 = arith.constant 2 : index
    %c0_100 = arith.constant 0 : index
    %69 = vector.load %arg1[%c7_98, %c2_99, %c0_100] : memref<8x24x128xf32, #tpu.memory_space<vmem>>, vector<1x22x128xf32>
    %70 = vector.shape_cast %69 : vector<1x22x128xf32> to vector<22x128xf32>
    %c168_101 = arith.constant 168 : index
    %c256_102 = arith.constant 256 : index
    %71 = vector.load %arg5[%c168_101, %c256_102] : memref<192x384xf32, #tpu.memory_space<vmem>>, vector<22x128xf32>
    tpu.vector_store %arg5[%c168_101, %c256_102], %70 {strides = array<i32>} : memref<192x384xf32, #tpu.memory_space<vmem>>, vector<22x128xf32>,
    %c0_103 = arith.constant 0 : index
    %c0_104 = arith.constant 0 : index
    %72 = vector.load %arg5[%c0_103, %c0_104] : memref<192x384xf32, #tpu.memory_space<vmem>>, vector<192x384xf32>
    %c0_105 = arith.constant 0 : index
    %c0_106 = arith.constant 0 : index
    %73 = vector.load %arg2[%c0_105, %c0_106] : memref<384x128xf32, #tpu.memory_space<vmem>>, vector<384x128xf32>
    %cst = arith.constant dense<0.000000e+00> : vector<192x128xf32>
    %74 = tpu.matmul %72, %73, %cst {dimension_numbers = #tpu.dot_dimension_numbers<[1], [0], [0], [1], [0, 0, 1, 1], [], []>} : vector<192x384xf32>, vector<384x128xf32>, vector<192x128xf32> -> vector<192x128xf32>
    %c0_107 = arith.constant 0 : index
    %c0_108 = arith.constant 0 : index
    %75 = vector.load %arg3[%c0_107, %c0_108] : memref<1x128xf32, #tpu.memory_space<vmem>>, vector<1x128xf32>
    %76 = vector.broadcast %75 : vector<1x128xf32> to vector<192x128xf32>
    %77 = arith.addf %74, %76 : vector<192x128xf32>
    %cst_109 = arith.constant 0.000000e+00 : f32
    %78 = vector.broadcast %cst_109 : f32 to vector<192x128xf32>
    %79 = arith.maximumf %77, %78 : vector<192x128xf32>
    %80 = vector.shape_cast %79 : vector<192x128xf32> to vector<8x24x128xf32>
    %81 = tpu.iota {dimensions = array<i32: 1>} : vector<8x24x128xi32>
    %c22_i32 = arith.constant 22 : i32
    %82 = vector.broadcast %c22_i32 : i32 to vector<8x24x128xi32>
    %83 = arith.cmpi slt, %81, %82 : vector<8x24x128xi32>
    %cst_110 = arith.constant 0.000000e+00 : f32
    %84 = vector.broadcast %cst_110 : f32 to vector<8x24x128xf32>
    %85 = arith.select %83, %80, %84 : vector<8x24x128xi1>, vector<8x24x128xf32>
    %cst_111 = arith.constant dense<0xFF800000> : vector<8x128xf32>
    %86 = vector.multi_reduction <maximumf>, %85, %cst_111 [1] : vector<8x24x128xf32> to vector<8x128xf32>
    %c0_112 = arith.constant 0 : index
    %c0_113 = arith.constant 0 : index
    %87 = vector.load %arg4[%c0_112, %c0_113] : memref<8x128xf32, #tpu.memory_space<vmem>>, vector<8x128xf32>
    tpu.vector_store %arg4[%c0_112, %c0_113], %86 {strides = array<i32>} : memref<8x128xf32, #tpu.memory_space<vmem>>, vector<8x128xf32>,
    return
  }
  func.func @transform_0(%arg0: i32) -> (i32, i32, i32) {
    %c0_i32 = arith.constant 0 : i32
    %c0_i32_0 = arith.constant 0 : i32
    %c0_i32_1 = arith.constant 0 : i32
    return %arg0, %c0_i32, %c0_i32_0 : i32, i32, i32
  }
  func.func @transform_1(%arg0: i32) -> (i32, i32) {
    %c0_i32 = arith.constant 0 : i32
    %c0_i32_0 = arith.constant 0 : i32
    %c0_i32_1 = arith.constant 0 : i32
    return %c0_i32, %c0_i32_0 : i32, i32
  }
  func.func @transform_2(%arg0: i32) -> (i32, i32) {
    %c0_i32 = arith.constant 0 : i32
    %c0_i32_0 = arith.constant 0 : i32
    %c0_i32_1 = arith.constant 0 : i32
    return %c0_i32, %c0_i32_0 : i32, i32
  }
  func.func @transform_3(%arg0: i32) -> (i32, i32) {
    %c0_i32 = arith.constant 0 : i32
    %c0_i32_0 = arith.constant 0 : i32
    return %arg0, %c0_i32 : i32, i32
  }
}

</mosaic_0001>

<llo_original>
// kernel: tpu_custom_call.1
$region0: #{tpu_custom_call.1}
  #allocation0 [shape = 'u32[]', space=smem, size = 0x4, offset = 0x4, fixed_abs, tag = 'smem constant byte address 0x4 - core index']
  #allocation1 [shape = 'u32[144,128]{1,0:T(1,128)}', space=vmem, size = 0x12000, scoped, tag = 'internal scratch']
  #allocation2 [shape = 'f32[192,384]{1,0:T(8,128)}', space=vmem, size = 0x48000, scoped, tag = 'scratch operand']
  %s0 = inlined_call_operand.hbm [shape: f32[16,24,128], index: 0, kind: input, shape index: {}]
  %s1 = inlined_call_operand.hbm [shape: f32[384,128], index: 1, kind: input, shape index: {}]
  %s2 = inlined_call_operand.vmem [shape: f32[1,128], index: 2, kind: input, shape index: {}]
  %s3 = inlined_call_operand.hbm [shape: f32[16,128], index: 3, kind: output, shape index: {}]
  %s4 = sld [smem:[#allocation0]]
  $region53: #{tpu_custom_call.1} parent=0
    _
  %s6 = ssub.s32 1, %s4
  %s7 = scalar_select 0, %s6, %s4
  $region1: #{tpu_custom_call.1} parent=0
    #allocation3 [shape = 'u8[196608]{0}', space=vmem, size = 0x30000, scoped, tag = 'input window, operand 0']
    #allocation4 [shape = 's32[2]{0}', space=sflag, size = 0x8, scoped, tag = 'scoped memory for tpu_custom_call.1']
    #allocation5 [shape = 's32[2]{0}', space=sflag, size = 0x8, scoped, tag = 'scoped memory for tpu_custom_call.1']
    #allocation6 [shape = 'u8[196608]{0}', space=vmem, size = 0x30000, scoped, tag = 'input window, operand 1, single buffered']
    #allocation7 [shape = 's32[1]{0}', space=sflag, size = 0x4, scoped, tag = 'scoped memory for tpu_custom_call.1']
    #allocation8 [shape = 'u8[8192]{0}', space=vmem, size = 0x2000, scoped, tag = 'output window, operand 0']
    %8 = vsyncpa [#allocation4], 0
    %s9 = scalar_lea.sflag [#allocation4], 1
    %10 = vsyncpa %s9, 0
    %11 = vsyncpa [#allocation7], 0
    %12 = vsyncpa [#allocation5], 0
    %s13 = scalar_lea.sflag [#allocation5], 1
    %14 = vsyncpa %s13, 0
    loop: start=0, step=1, limit=4
    $region2: #{tpu_custom_call.1} parent=1 // loop_pre_header
      _
    $region3: #{tpu_custom_call.1} parent=1 // loop_header
      %s16 = sphi 0, %s20
      %p17 = scmp.ge.s32.totalorder %s16, 4
      %s26 = sphi 0, %s28
      %s29 = sphi 0, %s26
      %s30 = sphi 0, %s29
      %s46 = sphi 0, %s30
      %s50 = sphi 0, %s50
      %s52 = sphi 0, %s50
      %s53 = sphi 0, %s52
      %s67 = sphi 0, %s53
      %s71 = sphi 0, %s71
      %s73 = sphi 0, %s71
      %s74 = sphi 0, %s73
      %s88 = sphi 0, %s74
      %s94 = sphi 0, %s96
      %s97 = sphi 0, %s94
      %s98 = sphi 0, %s97
      %s114 = sphi 0, %s98
    $region4: #{tpu_custom_call.1} parent=1 // loop_header_branch
      %19 = sbr.rel (%p17) target = $region8
    $region5: #{tpu_custom_call.1} parent=1 // loop_body
      %s21 = ssub.s32 %s16, 1
      %s22 = ssub.s32 %s16, 2
      %s23 = sadd.s32 %s16, 1
      %s24 = ssub.s32 %s16, %s23
      %p25 = scmp.eq.s32.totalorder %s24, 0
      %s27 = sadd.s32 %s26, 1
      %s28 = scalar_select %p25, %s26, %s27
      %p31 = pneg %p25
      %p32 = scmp.eq.s32.totalorder %s16, 1
      %p33 = por %p31, %p32
      %p34 = scmp.ne.s32.totalorder %s26, %s29
      %p35 = scmp.eq.s32.totalorder %s16, 0
      %p36 = por %p34, %p35
      %p37 = scmp.ne.s32.totalorder %s26, %s29
      %p38 = scmp.eq.s32.totalorder %s21, 1
      %p39 = por %p37, %p38
      %p40 = scmp.ne.s32.totalorder %s29, %s30
      %p41 = scmp.eq.s32.totalorder %s21, 0
      %p42 = por %p40, %p41
      %p43 = scmp.ne.s32.totalorder %s29, %s30
      %p44 = scmp.eq.s32.totalorder %s22, 1
      %p45 = por %p43, %p44
      %p47 = scmp.ne.s32.totalorder %s30, %s46
      %p48 = scmp.eq.s32.totalorder %s22, 0
      %p49 = por %p47, %p48
      %s51 = sadd.s32 %s50, 1
      %p54 = scmp.eq.s32.totalorder %s16, 1
      %p55 = scmp.ne.s32.totalorder %s50, %s52
      %p56 = scmp.eq.s32.totalorder %s16, 0
      %p57 = por %p55, %p56
      %p58 = scmp.ne.s32.totalorder %s50, %s52
      %p59 = scmp.eq.s32.totalorder %s21, 1
      %p60 = por %p58, %p59
      %p61 = scmp.ne.s32.totalorder %s52, %s53
      %p62 = scmp.eq.s32.totalorder %s21, 0
      %p63 = por %p61, %p62
      %p64 = scmp.ne.s32.totalorder %s52, %s53
      %p65 = scmp.eq.s32.totalorder %s22, 1
      %p66 = por %p64, %p65
      %p68 = scmp.ne.s32.totalorder %s53, %s67
      %p69 = scmp.eq.s32.totalorder %s22, 0
      %p70 = por %p68, %p69
      %s72 = sadd.s32 %s71, 1
      %p75 = scmp.eq.s32.totalorder %s16, 1
      %p76 = scmp.ne.s32.totalorder %s71, %s73
      %p77 = scmp.eq.s32.totalorder %s16, 0
      %p78 = por %p76, %p77
      %p79 = scmp.ne.s32.totalorder %s71, %s73
      %p80 = scmp.eq.s32.totalorder %s21, 1
      %p81 = por %p79, %p80
      %p82 = scmp.ne.s32.totalorder %s73, %s74
      %p83 = scmp.eq.s32.totalorder %s21, 0
      %p84 = por %p82, %p83
      %p85 = scmp.ne.s32.totalorder %s73, %s74
      %p86 = scmp.eq.s32.totalorder %s22, 1
      %p87 = por %p85, %p86
      %p89 = scmp.ne.s32.totalorder %s74, %s88
      %p90 = scmp.eq.s32.totalorder %s22, 0
      %p91 = por %p89, %p90
      %s92 = ssub.s32 %s16, %s23
      %p93 = scmp.eq.s32.totalorder %s92, 0
      %s95 = sadd.s32 %s94, 1
      %s96 = scalar_select %p93, %s94, %s95
      %p99 = pneg %p93
      %p100 = scmp.eq.s32.totalorder %s16, 1
      %p101 = por %p99, %p100
      %p102 = scmp.ne.s32.totalorder %s94, %s97
      %p103 = scmp.eq.s32.totalorder %s16, 0
      %p104 = por %p102, %p103
      %p105 = scmp.ne.s32.totalorder %s94, %s97
      %p106 = scmp.eq.s32.totalorder %s21, 1
      %p107 = por %p105, %p106
      %p108 = scmp.ne.s32.totalorder %s97, %s98
      %p109 = scmp.eq.s32.totalorder %s21, 0
      %p110 = por %p108, %p109
      %p111 = scmp.ne.s32.totalorder %s97, %s98
      %p112 = scmp.eq.s32.totalorder %s22, 1
      %p113 = por %p111, %p112
      %p115 = scmp.ne.s32.totalorder %s98, %s114
      %p116 = scmp.eq.s32.totalorder %s22, 0
      %p117 = por %p115, %p116
      %p118 = scmp.le.s32.totalorder 1, %s16
      %p119 = scmp.lt.s32.totalorder %s16, 3
      %p120 = pnand %p118, %p119
      %p121 = pneg %p120
      // Predicated region
      $region9: #{tpu_custom_call.1} parent=5 // pred_check
        _
      $region10: #{tpu_custom_call.1} parent=5 // pred_check_branch
        %123 = sbr.rel (%p120) target = $region12
      $region11: #{tpu_custom_call.1} parent=5 // pred_region
        %s124 = ssub.s32 %s16, 1
        // Predicated region
        $region13: #{tpu_custom_call.1} parent=11 // pred_check
          %p125 = pneg %p63
        $region14: #{tpu_custom_call.1} parent=11 // pred_check_branch
          %127 = sbr.rel (%p125) target = $region16
        $region15: #{tpu_custom_call.1} parent=11 // pred_region
          %s129 = ssub.s32 6144, 6144
          %130 = vsyncadd [#allocation7], %s129
          %s131 = sshll.u32 [#allocation6], 4
          %s132 = int_to_ptr.vmem [resolvable:$true] %s131
          %137 = dma.hbm_to_vmem [thread:$0]  %s1, 6144, %s132, [#allocation7], 128, 128, 8
        $region16: #{tpu_custom_call.1} parent=11 // pred_fallthru
          _
        // Predicated region
        $region17: #{tpu_custom_call.1} parent=11 // pred_check
          %p138 = pneg %p84
        $region18: #{tpu_custom_call.1} parent=11 // pred_check_branch
          %140 = sbr.rel (%p138) target = $region20
        $region19: #{tpu_custom_call.1} parent=11 // pred_region
          _
        $region20: #{tpu_custom_call.1} parent=11 // pred_fallthru
          _
      $region12: #{tpu_custom_call.1} parent=5 // pred_fallthru
        _
      %p141 = scmp.lt.s32.totalorder %s16, 2
      // Predicated region
      $region21: #{tpu_custom_call.1} parent=5 // pred_check
        %p142 = pneg %p141
      $region22: #{tpu_custom_call.1} parent=5 // pred_check_branch
        %144 = sbr.rel (%p142) target = $region24
      $region23: #{tpu_custom_call.1} parent=5 // pred_region
        // Predicated region
        $region25: #{tpu_custom_call.1} parent=23 // pred_check
          %p145 = pneg %p36
        $region26: #{tpu_custom_call.1} parent=23 // pred_check_branch
          %147 = sbr.rel (%p145) target = $region28
        $region27: #{tpu_custom_call.1} parent=23 // pred_region
          %s148 = sand.u32 %s26, 1
          %s149 = scalar_lea.sflag [#allocation4], %s148
          %s150 = sand.u32 %s26, 1
          %s151 = smul.addr %s150, 192
          %s152 = scalar_lea.vmem [#allocation3], %s151
          %s153 = smul.u32 8, %s16
          %s155 = ssub.s32 3072, 3072
          %156 = vsyncadd %s149, %s155
          %s157 = smul.addr %s153, 3
          %s158 = smul.addr %s157, 128
          %s159 = scalar_lea.hbm %s0, %s158
          %s160 = sshll.u32 %s152, 4
          %s161 = int_to_ptr.vmem [resolvable:$true] %s160
          %166 = dma.hbm_to_vmem [thread:$0]  %s159, 3072, %s161, %s149, 128, 128, 8
        $region28: #{tpu_custom_call.1} parent=23 // pred_fallthru
          _
      $region24: #{tpu_custom_call.1} parent=5 // pred_fallthru
        _
      %p167 = scmp.le.s32.totalorder 1, %s16
      %p168 = scmp.lt.s32.totalorder %s16, 3
      %p169 = pnand %p167, %p168
      %p170 = pneg %p169
      // Predicated region
      $region29: #{tpu_custom_call.1} parent=5 // pred_check
        _
      $region30: #{tpu_custom_call.1} parent=5 // pred_check_branch
        %172 = sbr.rel (%p169) target = $region32
      $region31: #{tpu_custom_call.1} parent=5 // pred_region
        %s173 = ssub.s32 %s16, 1
        %s174 = sand.u32 %s29, 1
        %s175 = scalar_lea.sflag [#allocation4], %s174
        %s176 = sand.u32 %s29, 1
        %s177 = smul.addr %s176, 192
        %s178 = scalar_lea.vmem [#allocation3], %s177
        // Predicated region
        $region33: #{tpu_custom_call.1} parent=31 // pred_check
          %p179 = pneg %p42
        $region34: #{tpu_custom_call.1} parent=31 // pred_check_branch
          %181 = sbr.rel (%p179) target = $region36
        $region35: #{tpu_custom_call.1} parent=31 // pred_region
          %182 = dma.done %s175, 3072
        $region36: #{tpu_custom_call.1} parent=31 // pred_fallthru
          _
        // Predicated region
        $region37: #{tpu_custom_call.1} parent=31 // pred_check
          %p183 = pneg %p63
        $region38: #{tpu_custom_call.1} parent=31 // pred_check_branch
          %185 = sbr.rel (%p183) target = $region40
        $region39: #{tpu_custom_call.1} parent=31 // pred_region
          %186 = dma.done [#allocation7], 6144
        $region40: #{tpu_custom_call.1} parent=31 // pred_fallthru
          _
        %s187 = sand.u32 %s29, 1
        %s188 = scalar_lea.sflag [#allocation4], %s187
        %s189 = sand.u32 %s29, 1
        %s190 = smul.addr %s189, 192
        %s191 = scalar_lea.vmem [#allocation3], %s190
        %p192 = pneg %p42
        %p193 = pneg %p39
        %p194 = pneg %p63
        %p195 = pneg %p60
        %p196 = pneg %p84
        %p197 = pneg %p81
        %p198 = pneg %p110
        %p199 = pneg %p107
        %s200 = sand.u32 %s97, 1
        %s201 = scalar_lea.sflag [#allocation5], %s200
        %s202 = sand.u32 %s97, 1
        %s203 = smul.addr %s202, 8
        %s204 = scalar_lea.vmem [#allocation8], %s203
        %s205 = smul.u32 8, %s21
        %v206 = vld [vmem:[%s178] sm:$0xff]
        %v207 = vld [vmem:[%s178 + $0x8] sm:$0xff]
        %v208 = vld [vmem:[%s178 + $0x10] sm:$0x3f]
        %209 = vst [vmem:[#allocation2] sm:$0xff] %v206
        %210 = vst [vmem:[#allocation2 + $0x18] sm:$0xff] %v207
        %211 = vst [vmem:[#allocation2 + $0x30] sm:$0x3f] %v208
        %v212 = vld [vmem:[%s178 + $0x1] sm:$0xff]
        %v213 = vld [vmem:[%s178 + $0x9] sm:$0xff]
        %v214 = vld [vmem:[%s178 + $0x11] sm:$0x3f]
        %215 = vst [vmem:[#allocation2 + $0x8] sm:$0xff] %v212
        %216 = vst [vmem:[#allocation2 + $0x20] sm:$0xff] %v213
        %217 = vst [vmem:[#allocation2 + $0x38] sm:$0x3f] %v214
        %v218 = vld [vmem:[%s178 + $0x2] sm:$0xff]
        %v219 = vld [vmem:[%s178 + $0xa] sm:$0xff]
        %v220 = vld [vmem:[%s178 + $0x12] sm:$0x3f]
        %221 = vst [vmem:[#allocation2 + $0x10] sm:$0xff] %v218
        %222 = vst [vmem:[#allocation2 + $0x28] sm:$0xff] %v219
        %223 = vst [vmem:[#allocation2 + $0x40] sm:$0x3f] %v220
        %s224 = scalar_lea.vmem %s178, 24 [#allocation3]
        %v225 = vld [vmem:[%s224] sm:$0xff]
        %v226 = vld [vmem:[%s224 + $0x8] sm:$0xff]
        %v227 = vld [vmem:[%s224 + $0x10] sm:$0x3f]
        %228 = vst [vmem:[#allocation2 + $0x48] sm:$0xff] %v225
        %229 = vst [vmem:[#allocation2 + $0x60] sm:$0xff] %v226
        %230 = vst [vmem:[#allocation2 + $0x78] sm:$0x3f] %v227
        %v231 = vld [vmem:[%s224 + $0x1] sm:$0xff]
        %v232 = vld [vmem:[%s224 + $0x9] sm:$0xff]
        %v233 = vld [vmem:[%s224 + $0x11] sm:$0x3f]
        %234 = vst [vmem:[#allocation2 + $0x50] sm:$0xff] %v231
        %235 = vst [vmem:[#allocation2 + $0x68] sm:$0xff] %v232
        %236 = vst [vmem:[#allocation2 + $0x80] sm:$0x3f] %v233
        %v237 = vld [vmem:[%s224 + $0x2] sm:$0xff]
        %v238 = vld [vmem:[%s224 + $0xa] sm:$0xff]
        %v239 = vld [vmem:[%s224 + $0x12] sm:$0x3f]
        %240 = vst [vmem:[#allocation2 + $0x58] sm:$0xff] %v237
        %241 = vst [vmem:[#allocation2 + $0x70] sm:$0xff] %v238
        %242 = vst [vmem:[#allocation2 + $0x88] sm:$0x3f] %v239
        %s243 = scalar_lea.vmem %s178, 48 [#allocation3]
        %v244 = vld [vmem:[%s243] sm:$0xff]
        %v245 = vld [vmem:[%s243 + $0x8] sm:$0xff]
        %v246 = vld [vmem:[%s243 + $0x10] sm:$0x3f]
        %247 = vst [vmem:[#allocation2 + $0x90] sm:$0xff] %v244
        %248 = vst [vmem:[#allocation2 + $0xa8] sm:$0xff] %v245
        %249 = vst [vmem:[#allocation2 + $0xc0] sm:$0x3f] %v246
        %v250 = vld [vmem:[%s243 + $0x1] sm:$0xff]
        %v251 = vld [vmem:[%s243 + $0x9] sm:$0xff]
        %v252 = vld [vmem:[%s243 + $0x11] sm:$0x3f]
        %253 = vst [vmem:[#allocation2 + $0x98] sm:$0xff] %v250
        %254 = vst [vmem:[#allocation2 + $0xb0] sm:$0xff] %v251
        %255 = vst [vmem:[#allocation2 + $0xc8] sm:$0x3f] %v252
        %v256 = vld [vmem:[%s243 + $0x2] sm:$0xff]
        %v257 = vld [vmem:[%s243 + $0xa] sm:$0xff]
        %v258 = vld [vmem:[%s243 + $0x12] sm:$0x3f]
        %259 = vst [vmem:[#allocation2 + $0xa0] sm:$0xff] %v256
        %260 = vst [vmem:[#allocation2 + $0xb8] sm:$0xff] %v257
        %261 = vst [vmem:[#allocation2 + $0xd0] sm:$0x3f] %v258
        %s262 = scalar_lea.vmem %s178, 72 [#allocation3]
        %v263 = vld [vmem:[%s262] sm:$0xff]
        %v264 = vld [vmem:[%s262 + $0x8] sm:$0xff]
        %v265 = vld [vmem:[%s262 + $0x10] sm:$0x3f]
        %266 = vst [vmem:[#allocation2 + $0xd8] sm:$0xff] %v263
        %267 = vst [vmem:[#allocation2 + $0xf0] sm:$0xff] %v264
        %268 = vst [vmem:[#allocation2 + $0x108] sm:$0x3f] %v265
        %v269 = vld [vmem:[%s262 + $0x1] sm:$0xff]
        %v270 = vld [vmem:[%s262 + $0x9] sm:$0xff]
        %v271 = vld [vmem:[%s262 + $0x11] sm:$0x3f]
        %272 = vst [vmem:[#allocation2 + $0xe0] sm:$0xff] %v269
        %273 = vst [vmem:[#allocation2 + $0xf8] sm:$0xff] %v270
        %274 = vst [vmem:[#allocation2 + $0x110] sm:$0x3f] %v271
        %v275 = vld [vmem:[%s262 + $0x2] sm:$0xff]
        %v276 = vld [vmem:[%s262 + $0xa] sm:$0xff]
        %v277 = vld [vmem:[%s262 + $0x12] sm:$0x3f]
        %278 = vst [vmem:[#allocation2 + $0xe8] sm:$0xff] %v275
        %279 = vst [vmem:[#allocation2 + $0x100] sm:$0xff] %v276
        %280 = vst [vmem:[#allocation2 + $0x118] sm:$0x3f] %v277
        %s281 = scalar_lea.vmem %s178, 96 [#allocation3]
        %v282 = vld [vmem:[%s281] sm:$0xff]
        %v283 = vld [vmem:[%s281 + $0x8] sm:$0xff]
        %v284 = vld [vmem:[%s281 + $0x10] sm:$0x3f]
        %285 = vst [vmem:[#allocation2 + $0x120] sm:$0xff] %v282
        %286 = vst [vmem:[#allocation2 + $0x138] sm:$0xff] %v283
        %287 = vst [vmem:[#allocation2 + $0x150] sm:$0x3f] %v284
        %v288 = vld [vmem:[%s281 + $0x1] sm:$0xff]
        %v289 = vld [vmem:[%s281 + $0x9] sm:$0xff]
        %v290 = vld [vmem:[%s281 + $0x11] sm:$0x3f]
        %291 = vst [vmem:[#allocation2 + $0x128] sm:$0xff] %v288
        %292 = vst [vmem:[#allocation2 + $0x140] sm:$0xff] %v289
        %293 = vst [vmem:[#allocation2 + $0x158] sm:$0x3f] %v290
        %v294 = vld [vmem:[%s281 + $0x2] sm:$0xff]
        %v295 = vld [vmem:[%s281 + $0xa] sm:$0xff]
        %v296 = vld [vmem:[%s281 + $0x12] sm:$0x3f]
        %297 = vst [vmem:[#allocation2 + $0x130] sm:$0xff] %v294
        %298 = vst [vmem:[#allocation2 + $0x148] sm:$0xff] %v295
        %299 = vst [vmem:[#allocation2 + $0x160] sm:$0x3f] %v296
        %s300 = scalar_lea.vmem %s178, 120 [#allocation3]
        %v301 = vld [vmem:[%s300] sm:$0xff]
        %v302 = vld [vmem:[%s300 + $0x8] sm:$0xff]
        %v303 = vld [vmem:[%s300 + $0x10] sm:$0x3f]
        %304 = vst [vmem:[#allocation2 + $0x168] sm:$0xff] %v301
        %305 = vst [vmem:[#allocation2 + $0x180] sm:$0xff] %v302
        %306 = vst [vmem:[#allocation2 + $0x198] sm:$0x3f] %v303
        %v307 = vld [vmem:[%s300 + $0x1] sm:$0xff]
        %v308 = vld [vmem:[%s300 + $0x9] sm:$0xff]
        %v309 = vld [vmem:[%s300 + $0x11] sm:$0x3f]
        %310 = vst [vmem:[#allocation2 + $0x170] sm:$0xff] %v307
        %311 = vst [vmem:[#allocation2 + $0x188] sm:$0xff] %v308
        %312 = vst [vmem:[#allocation2 + $0x1a0] sm:$0x3f] %v309
        %v313 = vld [vmem:[%s300 + $0x2] sm:$0xff]
        %v314 = vld [vmem:[%s300 + $0xa] sm:$0xff]
        %v315 = vld [vmem:[%s300 + $0x12] sm:$0x3f]
        %316 = vst [vmem:[#allocation2 + $0x178] sm:$0xff] %v313
        %317 = vst [vmem:[#allocation2 + $0x190] sm:$0xff] %v314
        %318 = vst [vmem:[#allocation2 + $0x1a8] sm:$0x3f] %v315
        %s319 = scalar_lea.vmem %s178, 144 [#allocation3]
        %v320 = vld [vmem:[%s319] sm:$0xff]
        %v321 = vld [vmem:[%s319 + $0x8] sm:$0xff]
        %v322 = vld [vmem:[%s319 + $0x10] sm:$0x3f]
        %323 = vst [vmem:[#allocation2 + $0x1b0] sm:$0xff] %v320
        %324 = vst [vmem:[#allocation2 + $0x1c8] sm:$0xff] %v321
        %325 = vst [vmem:[#allocation2 + $0x1e0] sm:$0x3f] %v322
        %v326 = vld [vmem:[%s319 + $0x1] sm:$0xff]
        %v327 = vld [vmem:[%s319 + $0x9] sm:$0xff]
        %v328 = vld [vmem:[%s319 + $0x11] sm:$0x3f]
        %329 = vst [vmem:[#allocation2 + $0x1b8] sm:$0xff] %v326
        %330 = vst [vmem:[#allocation2 + $0x1d0] sm:$0xff] %v327
        %331 = vst [vmem:[#allocation2 + $0x1e8] sm:$0x3f] %v328
        %v332 = vld [vmem:[%s319 + $0x2] sm:$0xff]
        %v333 = vld [vmem:[%s319 + $0xa] sm:$0xff]
        %v334 = vld [vmem:[%s319 + $0x12] sm:$0x3f]
        %335 = vst [vmem:[#allocation2 + $0x1c0] sm:$0xff] %v332
        %336 = vst [vmem:[#allocation2 + $0x1d8] sm:$0xff] %v333
        %337 = vst [vmem:[#allocation2 + $0x1f0] sm:$0x3f] %v334
        %s338 = scalar_lea.vmem %s178, 168 [#allocation3]
        %v339 = vld [vmem:[%s338] sm:$0xff]
        %v340 = vld [vmem:[%s338 + $0x8] sm:$0xff]
        %v341 = vld [vmem:[%s338 + $0x10] sm:$0x3f]
        %342 = vst [vmem:[#allocation2 + $0x1f8] sm:$0xff] %v339
        %343 = vst [vmem:[#allocation2 + $0x210] sm:$0xff] %v340
        %344 = vst [vmem:[#allocation2 + $0x228] sm:$0x3f] %v341
        %v345 = vld [vmem:[%s338 + $0x1] sm:$0xff]
        %v346 = vld [vmem:[%s338 + $0x9] sm:$0xff]
        %v347 = vld [vmem:[%s338 + $0x11] sm:$0x3f]
        %348 = vst [vmem:[#allocation2 + $0x200] sm:$0xff] %v345
        %349 = vst [vmem:[#allocation2 + $0x218] sm:$0xff] %v346
        %350 = vst [vmem:[#allocation2 + $0x230] sm:$0x3f] %v347
        %v351 = vld [vmem:[%s338 + $0x2] sm:$0xff]
        %v352 = vld [vmem:[%s338 + $0xa] sm:$0xff]
        %v353 = vld [vmem:[%s338 + $0x12] sm:$0x3f]
        %354 = vst [vmem:[#allocation2 + $0x208] sm:$0xff] %v351
        %355 = vst [vmem:[#allocation2 + $0x220] sm:$0xff] %v352
        %356 = vst [vmem:[#allocation2 + $0x238] sm:$0x3f] %v353
        %v357 = vld [vmem:[#allocation2] sm:$0xff]
        %v358 = vld [vmem:[#allocation2 + $0x8] sm:$0xff]
        %v359 = vld [vmem:[#allocation2 + $0x10] sm:$0xff]
        %v360 = vld [vmem:[#allocation2 + $0x18] sm:$0xff]
        %v361 = vld [vmem:[#allocation2 + $0x20] sm:$0xff]
        %v362 = vld [vmem:[#allocation2 + $0x28] sm:$0xff]
        %v363 = vld [vmem:[#allocation2 + $0x30] sm:$0xff]
        %v364 = vld [vmem:[#allocation2 + $0x38] sm:$0xff]
        %v365 = vld [vmem:[#allocation2 + $0x40] sm:$0xff]
        %v366 = vld [vmem:[#allocation2 + $0x48] sm:$0xff]
        %v367 = vld [vmem:[#allocation2 + $0x50] sm:$0xff]
        %v368 = vld [vmem:[#allocation2 + $0x58] sm:$0xff]
        %v369 = vld [vmem:[#allocation2 + $0x60] sm:$0xff]
        %v370 = vld [vmem:[#allocation2 + $0x68] sm:$0xff]
        %v371 = vld [vmem:[#allocation2 + $0x70] sm:$0xff]
        %v372 = vld [vmem:[#allocation2 + $0x78] sm:$0xff]
        %v373 = vld [vmem:[#allocation2 + $0x80] sm:$0xff]
        %v374 = vld [vmem:[#allocation2 + $0x88] sm:$0xff]
        %v375 = vld [vmem:[#allocation2 + $0x90] sm:$0xff]
        %v376 = vld [vmem:[#allocation2 + $0x98] sm:$0xff]
        %v377 = vld [vmem:[#allocation2 + $0xa0] sm:$0xff]
        %v378 = vld [vmem:[#allocation2 + $0xa8] sm:$0xff]
        %v379 = vld [vmem:[#allocation2 + $0xb0] sm:$0xff]
        %v380 = vld [vmem:[#allocation2 + $0xb8] sm:$0xff]
        %v381 = vld [vmem:[#allocation2 + $0xc0] sm:$0xff]
        %v382 = vld [vmem:[#allocation2 + $0xc8] sm:$0xff]
        %v383 = vld [vmem:[#allocation2 + $0xd0] sm:$0xff]
        %v384 = vld [vmem:[#allocation2 + $0xd8] sm:$0xff]
        %v385 = vld [vmem:[#allocation2 + $0xe0] sm:$0xff]
        %v386 = vld [vmem:[#allocation2 + $0xe8] sm:$0xff]
        %v387 = vld [vmem:[#allocation2 + $0xf0] sm:$0xff]
        %v388 = vld [vmem:[#allocation2 + $0xf8] sm:$0xff]
        %v389 = vld [vmem:[#allocation2 + $0x100] sm:$0xff]
        %v390 = vld [vmem:[#allocation2 + $0x108] sm:$0xff]
        %v391 = vld [vmem:[#allocation2 + $0x110] sm:$0xff]
        %v392 = vld [vmem:[#allocation2 + $0x118] sm:$0xff]
        %v393 = vld [vmem:[#allocation2 + $0x120] sm:$0xff]
        %v394 = vld [vmem:[#allocation2 + $0x128] sm:$0xff]
        %v395 = vld [vmem:[#allocation2 + $0x130] sm:$0xff]
        %v396 = vld [vmem:[#allocation2 + $0x138] sm:$0xff]
        %v397 = vld [vmem:[#allocation2 + $0x140] sm:$0xff]
        %v398 = vld [vmem:[#allocation2 + $0x148] sm:$0xff]
        %v399 = vld [vmem:[#allocation2 + $0x150] sm:$0xff]
        %v400 = vld [vmem:[#allocation2 + $0x158] sm:$0xff]
        %v401 = vld [vmem:[#allocation2 + $0x160] sm:$0xff]
        %v402 = vld [vmem:[#allocation2 + $0x168] sm:$0xff]
        %v403 = vld [vmem:[#allocation2 + $0x170] sm:$0xff]
        %v404 = vld [vmem:[#allocation2 + $0x178] sm:$0xff]
        %v405 = vld [vmem:[#allocation2 + $0x180] sm:$0xff]
        %v406 = vld [vmem:[#allocation2 + $0x188] sm:$0xff]
        %v407 = vld [vmem:[#allocation2 + $0x190] sm:$0xff]
        %v408 = vld [vmem:[#allocation2 + $0x198] sm:$0xff]
        %v409 = vld [vmem:[#allocation2 + $0x1a0] sm:$0xff]
        %v410 = vld [vmem:[#allocation2 + $0x1a8] sm:$0xff]
        %v411 = vld [vmem:[#allocation2 + $0x1b0] sm:$0xff]
        %v412 = vld [vmem:[#allocation2 + $0x1b8] sm:$0xff]
        %v413 = vld [vmem:[#allocation2 + $0x1c0] sm:$0xff]
        %v414 = vld [vmem:[#allocation2 + $0x1c8] sm:$0xff]
        %v415 = vld [vmem:[#allocation2 + $0x1d0] sm:$0xff]
        %v416 = vld [vmem:[#allocation2 + $0x1d8] sm:$0xff]
        %v417 = vld [vmem:[#allocation2 + $0x1e0] sm:$0xff]
        %v418 = vld [vmem:[#allocation2 + $0x1e8] sm:$0xff]
        %v419 = vld [vmem:[#allocation2 + $0x1f0] sm:$0xff]
        %v420 = vld [vmem:[#allocation2 + $0x1f8] sm:$0xff]
        %v421 = vld [vmem:[#allocation2 + $0x200] sm:$0xff]
        %v422 = vld [vmem:[#allocation2 + $0x208] sm:$0xff]
        %v423 = vld [vmem:[#allocation2 + $0x210] sm:$0xff]
        %v424 = vld [vmem:[#allocation2 + $0x218] sm:$0xff]
        %v425 = vld [vmem:[#allocation2 + $0x220] sm:$0xff]
        %v426 = vld [vmem:[#allocation2 + $0x228] sm:$0xff]
        %v427 = vld [vmem:[#allocation2 + $0x230] sm:$0xff]
        %v428 = vld [vmem:[#allocation2 + $0x238] sm:$0xff]
        %v429 = vld [vmem:[#allocation6] sm:$0xff]
        %v430 = vld [vmem:[#allocation6 + $0x8] sm:$0xff]
        %v431 = vld [vmem:[#allocation6 + $0x10] sm:$0xff]
        %v432 = vld [vmem:[#allocation6 + $0x18] sm:$0xff]
        %v433 = vld [vmem:[#allocation6 + $0x20] sm:$0xff]
        %v434 = vld [vmem:[#allocation6 + $0x28] sm:$0xff]
        %v435 = vld [vmem:[#allocation6 + $0x30] sm:$0xff]
        %v436 = vld [vmem:[#allocation6 + $0x38] sm:$0xff]
        %v437 = vld [vmem:[#allocation6 + $0x40] sm:$0xff]
        %v438 = vld [vmem:[#allocation6 + $0x48] sm:$0xff]
        %v439 = vld [vmem:[#allocation6 + $0x50] sm:$0xff]
        %v440 = vld [vmem:[#allocation6 + $0x58] sm:$0xff]
        %v441 = vld [vmem:[#allocation6 + $0x60] sm:$0xff]
        %v442 = vld [vmem:[#allocation6 + $0x68] sm:$0xff]
        %v443 = vld [vmem:[#allocation6 + $0x70] sm:$0xff]
        %v444 = vld [vmem:[#allocation6 + $0x78] sm:$0xff]
        %v445 = vld [vmem:[#allocation6 + $0x80] sm:$0xff]
        %v446 = vld [vmem:[#allocation6 + $0x88] sm:$0xff]
        %v447 = vld [vmem:[#allocation6 + $0x90] sm:$0xff]
        %v448 = vld [vmem:[#allocation6 + $0x98] sm:$0xff]
        %v449 = vld [vmem:[#allocation6 + $0xa0] sm:$0xff]
        %v450 = vld [vmem:[#allocation6 + $0xa8] sm:$0xff]
        %v451 = vld [vmem:[#allocation6 + $0xb0] sm:$0xff]
        %v452 = vld [vmem:[#allocation6 + $0xb8] sm:$0xff]
        %v453 = vld [vmem:[#allocation6 + $0xc0] sm:$0xff]
        %v454 = vld [vmem:[#allocation6 + $0xc8] sm:$0xff]
        %v455 = vld [vmem:[#allocation6 + $0xd0] sm:$0xff]
        %v456 = vld [vmem:[#allocation6 + $0xd8] sm:$0xff]
        %v457 = vld [vmem:[#allocation6 + $0xe0] sm:$0xff]
        %v458 = vld [vmem:[#allocation6 + $0xe8] sm:$0xff]
        %v459 = vld [vmem:[#allocation6 + $0xf0] sm:$0xff]
        %v460 = vld [vmem:[#allocation6 + $0xf8] sm:$0xff]
        %v461 = vld [vmem:[#allocation6 + $0x100] sm:$0xff]
        %v462 = vld [vmem:[#allocation6 + $0x108] sm:$0xff]
        %v463 = vld [vmem:[#allocation6 + $0x110] sm:$0xff]
        %v464 = vld [vmem:[#allocation6 + $0x118] sm:$0xff]
        %v465 = vld [vmem:[#allocation6 + $0x120] sm:$0xff]
        %v466 = vld [vmem:[#allocation6 + $0x128] sm:$0xff]
        %v467 = vld [vmem:[#allocation6 + $0x130] sm:$0xff]
        %v468 = vld [vmem:[#allocation6 + $0x138] sm:$0xff]
        %v469 = vld [vmem:[#allocation6 + $0x140] sm:$0xff]
        %v470 = vld [vmem:[#allocation6 + $0x148] sm:$0xff]
        %v471 = vld [vmem:[#allocation6 + $0x150] sm:$0xff]
        %v472 = vld [vmem:[#allocation6 + $0x158] sm:$0xff]
        %v473 = vld [vmem:[#allocation6 + $0x160] sm:$0xff]
        %v474 = vld [vmem:[#allocation6 + $0x168] sm:$0xff]
        %v475 = vld [vmem:[#allocation6 + $0x170] sm:$0xff]
        %v476 = vld [vmem:[#allocation6 + $0x178] sm:$0xff]
        %v477 = vld [vmem:[%s2] sm:$0x1]
        %v479 = vlaneseq
        %v480 = vshrl.u32 %v479, 7
        %v481 = vsub.s32 0, %v480
        %v482 = vrot.slane %v477, %v481
        %484 = vmatprep.subr.mxu0 0.0
        %485 = vmatpush1.msra.mxu0 %v429
        %486 = vmatprep.subr.mxu0 0.0
        %487 = vmatpush1.msra.mxu0 %v430
        %488 = vmatprep.subr.mxu0 0.0
        %489 = vmatpush1.msra.mxu0 %v431
        %490 = vmatprep.subr.mxu0 0.0
        %491 = vmatpush1.msra.mxu0 %v432
        %492 = vmatprep.subr.mxu0 0.0
        %493 = vmatpush1.msra.mxu0 %v433
        %494 = vmatprep.subr.mxu0 0.0
        %495 = vmatpush1.msra.mxu0 %v434
        %496 = vmatprep.subr.mxu0 0.0
        %497 = vmatpush1.msra.mxu0 %v435
        %498 = vmatprep.subr.mxu0 0.0
        %499 = vmatpush1.msra.mxu0 %v436
        %500 = vmatprep.subr.mxu0 0.0
        %501 = vmatpush1.msra.mxu0 %v437
        %502 = vmatprep.subr.mxu0 0.0
        %503 = vmatpush1.msra.mxu0 %v438
        %504 = vmatprep.subr.mxu0 0.0
        %505 = vmatpush1.msra.mxu0 %v439
        %506 = vmatprep.subr.mxu0 0.0
        %507 = vmatpush1.msra.mxu0 %v440
        %508 = vmatprep.subr.mxu0 0.0
        %509 = vmatpush1.msra.mxu0 %v441
        %510 = vmatprep.subr.mxu0 0.0
        %511 = vmatpush1.msra.mxu0 %v442
        %512 = vmatprep.subr.mxu0 0.0
        %513 = vmatpush1.msra.mxu0 %v443
        %514 = vmatprep.subr.mxu0 0.0
        %515 = vmatpush1.msra.mxu0 %v444
        %516 = vmatprep.subr.mxu0 0.0
        %517 = vmatpush1.msra.mxu0 %v445
        %518 = vmatprep.subr.mxu0 0.0
        %519 = vmatpush1.msra.mxu0 %v446
        %520 = vmatprep.subr.mxu0 0.0
        %521 = vmatpush1.msra.mxu0 %v447
        %522 = vmatprep.subr.mxu0 0.0
        %523 = vmatpush1.msra.mxu0 %v448
        %524 = vmatprep.subr.mxu0 0.0
        %525 = vmatpush1.msra.mxu0 %v449
        %526 = vmatprep.subr.mxu0 0.0
        %527 = vmatpush1.msra.mxu0 %v450
        %528 = vmatprep.subr.mxu0 0.0
        %529 = vmatpush1.msra.mxu0 %v451
        %530 = vmatprep.subr.mxu0 0.0
        %531 = vmatpush1.msra.mxu0 %v452
        %532 = vmatprep.subr.mxu0 0.0
        %533 = vmatpush1.msra.mxu0 %v453
        %534 = vmatprep.subr.mxu0 0.0
        %535 = vmatpush1.msra.mxu0 %v454
        %536 = vmatprep.subr.mxu0 0.0
        %537 = vmatpush1.msra.mxu0 %v455
        %538 = vmatprep.subr.mxu0 0.0
        %539 = vmatpush1.msra.mxu0 %v456
        %540 = vmatprep.subr.mxu0 0.0
        %541 = vmatpush1.msra.mxu0 %v457
        %542 = vmatprep.subr.mxu0 0.0
        %543 = vmatpush1.msra.mxu0 %v458
        %544 = vmatprep.subr.mxu0 0.0
        %545 = vmatpush1.msra.mxu0 %v459
        %546 = vmatprep.subr.mxu0 0.0
        %547 = vmatpush1.msra.mxu0 %v460
        %548 = vmatprep.mubr.f32.mxu0 %v358
        %549 = vmatmul.mubr.f32.gmra.mrb[0].mxu0 %v357
        %v550 = vpop.f32.mrb[0].mxu0
        %v551 = vadd.f32 %v482, %v550
        %v552 = vpop.f32.mrb[0].mxu0
        %553 = vmatprep.mubr.f32.mxu0 %v361
        %554 = vmatmul.mubr.f32.gmra.mrb[0].mxu0 %v360
        %v555 = vpop.f32.mrb[0].mxu0
        %v556 = vadd.f32 %v482, %v555
        %v557 = vpop.f32.mrb[0].mxu0
        %558 = vmatprep.mubr.f32.mxu0 %v364
        %559 = vmatmul.mubr.f32.gmra.mrb[0].mxu0 %v363
        %v560 = vpop.f32.mrb[0].mxu0
        %v561 = vadd.f32 %v482, %v560
        %v562 = vpop.f32.mrb[0].mxu0
        %563 = vmatprep.mubr.f32.mxu0 %v367
        %564 = vmatmul.mubr.f32.gmra.mrb[0].mxu0 %v366
        %v565 = vpop.f32.mrb[0].mxu0
        %v566 = vadd.f32 %v482, %v565
        %v567 = vpop.f32.mrb[0].mxu0
        %568 = vmatprep.mubr.f32.mxu0 %v370
        %569 = vmatmul.mubr.f32.gmra.mrb[0].mxu0 %v369
        %v570 = vpop.f32.mrb[0].mxu0
        %v571 = vadd.f32 %v482, %v570
        %v572 = vpop.f32.mrb[0].mxu0
        %573 = vmatprep.mubr.f32.mxu0 %v373
        %574 = vmatmul.mubr.f32.gmra.mrb[0].mxu0 %v372
        %v575 = vpop.f32.mrb[0].mxu0
        %v576 = vadd.f32 %v482, %v575
        %v577 = vpop.f32.mrb[0].mxu0
        %578 = vmatprep.mubr.f32.mxu0 %v376
        %579 = vmatmul.mubr.f32.gmra.mrb[0].mxu0 %v375
        %v580 = vpop.f32.mrb[0].mxu0
        %v581 = vadd.f32 %v482, %v580
        %v582 = vpop.f32.mrb[0].mxu0
        %583 = vmatprep.mubr.f32.mxu0 %v379
        %584 = vmatmul.mubr.f32.gmra.mrb[0].mxu0 %v378
        %v585 = vpop.f32.mrb[0].mxu0
        %v586 = vadd.f32 %v482, %v585
        %v587 = vpop.f32.mrb[0].mxu0
        %588 = vmatprep.mubr.f32.mxu0 %v382
        %589 = vmatmul.mubr.f32.gmra.mrb[0].mxu0 %v381
        %v590 = vpop.f32.mrb[0].mxu0
        %v591 = vadd.f32 %v482, %v590
        %v592 = vpop.f32.mrb[0].mxu0
        %593 = vmatprep.mubr.f32.mxu0 %v385
        %594 = vmatmul.mubr.f32.gmra.mrb[0].mxu0 %v384
        %v595 = vpop.f32.mrb[0].mxu0
        %v596 = vadd.f32 %v482, %v595
        %v597 = vpop.f32.mrb[0].mxu0
        %598 = vmatprep.mubr.f32.mxu0 %v388
        %599 = vmatmul.mubr.f32.gmra.mrb[0].mxu0 %v387
        %v600 = vpop.f32.mrb[0].mxu0
        %v601 = vadd.f32 %v482, %v600
        %v602 = vpop.f32.mrb[0].mxu0
        %603 = vmatprep.mubr.f32.mxu0 %v391
        %604 = vmatmul.mubr.f32.gmra.mrb[0].mxu0 %v390
        %v605 = vpop.f32.mrb[0].mxu0
        %v606 = vadd.f32 %v482, %v605
        %v607 = vpop.f32.mrb[0].mxu0
        %608 = vmatprep.mubr.f32.mxu0 %v394
        %609 = vmatmul.mubr.f32.gmra.mrb[0].mxu0 %v393
        %v610 = vpop.f32.mrb[0].mxu0
        %v611 = vadd.f32 %v482, %v610
        %v612 = vpop.f32.mrb[0].mxu0
        %613 = vmatprep.mubr.f32.mxu0 %v397
        %614 = vmatmul.mubr.f32.gmra.mrb[0].mxu0 %v396
        %v615 = vpop.f32.mrb[0].mxu0
        %v616 = vadd.f32 %v482, %v615
        %v617 = vpop.f32.mrb[0].mxu0
        %618 = vmatprep.mubr.f32.mxu0 %v400
        %619 = vmatmul.mubr.f32.gmra.mrb[0].mxu0 %v399
        %v620 = vpop.f32.mrb[0].mxu0
        %v621 = vadd.f32 %v482, %v620
        %v622 = vpop.f32.mrb[0].mxu0
        %623 = vmatprep.mubr.f32.mxu0 %v403
        %624 = vmatmul.mubr.f32.gmra.mrb[0].mxu0 %v402
        %v625 = vpop.f32.mrb[0].mxu0
        %v626 = vadd.f32 %v482, %v625
        %v627 = vpop.f32.mrb[0].mxu0
        %628 = vmatprep.mubr.f32.mxu0 %v406
        %629 = vmatmul.mubr.f32.gmra.mrb[0].mxu0 %v405
        %v630 = vpop.f32.mrb[0].mxu0
        %v631 = vadd.f32 %v482, %v630
        %v632 = vpop.f32.mrb[0].mxu0
        %633 = vmatprep.mubr.f32.mxu0 %v409
        %634 = vmatmul.mubr.f32.gmra.mrb[0].mxu0 %v408
        %v635 = vpop.f32.mrb[0].mxu0
        %v636 = vadd.f32 %v482, %v635
        %v637 = vpop.f32.mrb[0].mxu0
        %638 = vmatprep.mubr.f32.mxu0 %v412
        %639 = vmatmul.mubr.f32.gmra.mrb[0].mxu0 %v411
        %v640 = vpop.f32.mrb[0].mxu0
        %v641 = vadd.f32 %v482, %v640
        %v642 = vpop.f32.mrb[0].mxu0
        %643 = vmatprep.mubr.f32.mxu0 %v415
        %644 = vmatmul.mubr.f32.gmra.mrb[0].mxu0 %v414
        %v645 = vpop.f32.mrb[0].mxu0
        %v646 = vadd.f32 %v482, %v645
        %v647 = vpop.f32.mrb[0].mxu0
        %648 = vmatprep.mubr.f32.mxu0 %v418
        %649 = vmatmul.mubr.f32.gmra.mrb[0].mxu0 %v417
        %v650 = vpop.f32.mrb[0].mxu0
        %v651 = vadd.f32 %v482, %v650
        %v652 = vpop.f32.mrb[0].mxu0
        %653 = vmatprep.mubr.f32.mxu0 %v421
        %654 = vmatmul.mubr.f32.gmra.mrb[0].mxu0 %v420
        %v655 = vpop.f32.mrb[0].mxu0
        %v656 = vadd.f32 %v482, %v655
        %v657 = vpop.f32.mrb[0].mxu0
        %658 = vmatprep.mubr.f32.mxu0 %v424
        %659 = vmatmul.mubr.f32.gmra.mrb[0].mxu0 %v423
        %v660 = vpop.f32.mrb[0].mxu0
        %v661 = vadd.f32 %v482, %v660
        %v662 = vpop.f32.mrb[0].mxu0
        %663 = vmatprep.mubr.f32.mxu0 %v427
        %664 = vmatmul.mubr.f32.gmra.mrb[0].mxu0 %v426
        %v665 = vpop.f32.mrb[0].mxu0
        %v666 = vadd.f32 %v482, %v665
        %v667 = vpop.f32.mrb[0].mxu0
        %668 = vdwg.mxu0
        %669 = vmatprep.subr.mxu0 0.0
        %670 = vmatpush1.msra.mxu0 %v461
        %671 = vmatprep.subr.mxu0 0.0
        %672 = vmatpush1.msra.mxu0 %v462
        %673 = vmatprep.subr.mxu0 0.0
        %674 = vmatpush1.msra.mxu0 %v463
        %675 = vmatprep.subr.mxu0 0.0
        %676 = vmatpush1.msra.mxu0 %v464
        %677 = vmatprep.subr.mxu0 0.0
        %678 = vmatpush1.msra.mxu0 %v465
        %679 = vmatprep.subr.mxu0 0.0
        %680 = vmatpush1.msra.mxu0 %v466
        %681 = vmatprep.subr.mxu0 0.0
        %682 = vmatpush1.msra.mxu0 %v467
        %683 = vmatprep.subr.mxu0 0.0
        %684 = vmatpush1.msra.mxu0 %v468
        %685 = vmatprep.subr.mxu0 0.0
        %686 = vmatpush1.msra.mxu0 %v469
        %687 = vmatprep.subr.mxu0 0.0
        %688 = vmatpush1.msra.mxu0 %v470
        %689 = vmatprep.subr.mxu0 0.0
        %690 = vmatpush1.msra.mxu0 %v471
        %691 = vmatprep.subr.mxu0 0.0
        %692 = vmatpush1.msra.mxu0 %v472
        %693 = vmatprep.subr.mxu0 0.0
        %694 = vmatpush1.msra.mxu0 %v473
        %695 = vmatprep.subr.mxu0 0.0
        %696 = vmatpush1.msra.mxu0 %v474
        %697 = vmatprep.subr.mxu0 0.0
        %698 = vmatpush1.msra.mxu0 %v475
        %699 = vmatprep.subr.mxu0 0.0
        %700 = vmatpush1.msra.mxu0 %v476
        %701 = vmatprep.subr.mxu0 0.0
        %702 = vmatpush1.msra.mxu0 0.0
        %703 = vmatprep.subr.mxu0 0.0
        %704 = vmatpush1.msra.mxu0 0.0
        %705 = vmatprep.subr.mxu0 0.0
        %706 = vmatpush1.msra.mxu0 0.0
        %707 = vmatprep.subr.mxu0 0.0
        %708 = vmatpush1.msra.mxu0 0.0
        %709 = vmatprep.subr.mxu0 0.0
        %710 = vmatpush1.msra.mxu0 0.0
        %711 = vmatprep.subr.mxu0 0.0
        %712 = vmatpush1.msra.mxu0 0.0
        %713 = vmatprep.subr.mxu0 0.0
        %714 = vmatpush1.msra.mxu0 0.0
        %715 = vmatprep.subr.mxu0 0.0
        %716 = vmatpush1.msra.mxu0 0.0
        %717 = vmatprep.subr.mxu0 0.0
        %718 = vmatpush1.msra.mxu0 0.0
        %719 = vmatprep.subr.mxu0 0.0
        %720 = vmatpush1.msra.mxu0 0.0
        %721 = vmatprep.subr.mxu0 0.0
        %722 = vmatpush1.msra.mxu0 0.0
        %723 = vmatprep.subr.mxu0 0.0
        %724 = vmatpush1.msra.mxu0 0.0
        %725 = vmatprep.subr.mxu0 0.0
        %726 = vmatpush1.msra.mxu0 0.0
        %727 = vmatprep.subr.mxu0 0.0
        %728 = vmatpush1.msra.mxu0 0.0
        %729 = vmatprep.subr.mxu0 0.0
        %730 = vmatpush1.msra.mxu0 0.0
        %731 = vmatprep.subr.mxu0 0.0
        %732 = vmatpush1.msra.mxu0 0.0
        %733 = vmatprep.mubr.f32.mxu0 0.0
        %734 = vmatmul.mubr.f32.gmra.mrb[0].mxu0 %v359
        %v735 = vpop.f32.mrb[0].mxu0
        %v736 = vadd.f32 %v551, %v735
        %v737 = vpop.f32.mrb[0].mxu0
        %738 = vmatprep.mubr.f32.mxu0 0.0
        %739 = vmatmul.mubr.f32.gmra.mrb[0].mxu0 %v362
        %v740 = vpop.f32.mrb[0].mxu0
        %v741 = vadd.f32 %v556, %v740
        %v742 = vpop.f32.mrb[0].mxu0
        %743 = vmatprep.mubr.f32.mxu0 0.0
        %744 = vmatmul.mubr.f32.gmra.mrb[0].mxu0 %v365
        %v745 = vpop.f32.mrb[0].mxu0
        %v746 = vadd.f32 %v561, %v745
        %v747 = vpop.f32.mrb[0].mxu0
        %748 = vmatprep.mubr.f32.mxu0 0.0
        %749 = vmatmul.mubr.f32.gmra.mrb[0].mxu0 %v368
        %v750 = vpop.f32.mrb[0].mxu0
        %v751 = vadd.f32 %v566, %v750
        %v752 = vpop.f32.mrb[0].mxu0
        %753 = vmatprep.mubr.f32.mxu0 0.0
        %754 = vmatmul.mubr.f32.gmra.mrb[0].mxu0 %v371
        %v755 = vpop.f32.mrb[0].mxu0
        %v756 = vadd.f32 %v571, %v755
        %v757 = vpop.f32.mrb[0].mxu0
        %758 = vmatprep.mubr.f32.mxu0 0.0
        %759 = vmatmul.mubr.f32.gmra.mrb[0].mxu0 %v374
        %v760 = vpop.f32.mrb[0].mxu0
        %v761 = vadd.f32 %v576, %v760
        %v762 = vpop.f32.mrb[0].mxu0
        %763 = vmatprep.mubr.f32.mxu0 0.0
        %764 = vmatmul.mubr.f32.gmra.mrb[0].mxu0 %v377
        %v765 = vpop.f32.mrb[0].mxu0
        %v766 = vadd.f32 %v581, %v765
        %v767 = vpop.f32.mrb[0].mxu0
        %768 = vmatprep.mubr.f32.mxu0 0.0
        %769 = vmatmul.mubr.f32.gmra.mrb[0].mxu0 %v380
        %v770 = vpop.f32.mrb[0].mxu0
        %v771 = vadd.f32 %v586, %v770
        %v772 = vpop.f32.mrb[0].mxu0
        %773 = vmatprep.mubr.f32.mxu0 0.0
        %774 = vmatmul.mubr.f32.gmra.mrb[0].mxu0 %v383
        %v775 = vpop.f32.mrb[0].mxu0
        %v776 = vadd.f32 %v591, %v775
        %v777 = vpop.f32.mrb[0].mxu0
        %778 = vmatprep.mubr.f32.mxu0 0.0
        %779 = vmatmul.mubr.f32.gmra.mrb[0].mxu0 %v386
        %v780 = vpop.f32.mrb[0].mxu0
        %v781 = vadd.f32 %v596, %v780
        %v782 = vpop.f32.mrb[0].mxu0
        %783 = vmatprep.mubr.f32.mxu0 0.0
        %784 = vmatmul.mubr.f32.gmra.mrb[0].mxu0 %v389
        %v785 = vpop.f32.mrb[0].mxu0
        %v786 = vadd.f32 %v601, %v785
        %v787 = vpop.f32.mrb[0].mxu0
        %788 = vmatprep.mubr.f32.mxu0 0.0
        %789 = vmatmul.mubr.f32.gmra.mrb[0].mxu0 %v392
        %v790 = vpop.f32.mrb[0].mxu0
        %v791 = vadd.f32 %v606, %v790
        %v792 = vpop.f32.mrb[0].mxu0
        %793 = vmatprep.mubr.f32.mxu0 0.0
        %794 = vmatmul.mubr.f32.gmra.mrb[0].mxu0 %v395
        %v795 = vpop.f32.mrb[0].mxu0
        %v796 = vadd.f32 %v611, %v795
        %v797 = vpop.f32.mrb[0].mxu0
        %798 = vmatprep.mubr.f32.mxu0 0.0
        %799 = vmatmul.mubr.f32.gmra.mrb[0].mxu0 %v398
        %v800 = vpop.f32.mrb[0].mxu0
        %v801 = vadd.f32 %v616, %v800
        %v802 = vpop.f32.mrb[0].mxu0
        %803 = vmatprep.mubr.f32.mxu0 0.0
        %804 = vmatmul.mubr.f32.gmra.mrb[0].mxu0 %v401
        %v805 = vpop.f32.mrb[0].mxu0
        %v806 = vadd.f32 %v621, %v805
        %v807 = vpop.f32.mrb[0].mxu0
        %808 = vmatprep.mubr.f32.mxu0 0.0
        %809 = vmatmul.mubr.f32.gmra.mrb[0].mxu0 %v404
        %v810 = vpop.f32.mrb[0].mxu0
        %v811 = vadd.f32 %v626, %v810
        %v812 = vpop.f32.mrb[0].mxu0
        %813 = vmatprep.mubr.f32.mxu0 0.0
        %814 = vmatmul.mubr.f32.gmra.mrb[0].mxu0 %v407
        %v815 = vpop.f32.mrb[0].mxu0
        %v816 = vadd.f32 %v631, %v815
        %v817 = vpop.f32.mrb[0].mxu0
        %818 = vmatprep.mubr.f32.mxu0 0.0
        %819 = vmatmul.mubr.f32.gmra.mrb[0].mxu0 %v410
        %v820 = vpop.f32.mrb[0].mxu0
        %v821 = vadd.f32 %v636, %v820
        %v822 = vpop.f32.mrb[0].mxu0
        %823 = vmatprep.mubr.f32.mxu0 0.0
        %824 = vmatmul.mubr.f32.gmra.mrb[0].mxu0 %v413
        %v825 = vpop.f32.mrb[0].mxu0
        %v826 = vadd.f32 %v641, %v825
        %v827 = vpop.f32.mrb[0].mxu0
        %828 = vmatprep.mubr.f32.mxu0 0.0
        %829 = vmatmul.mubr.f32.gmra.mrb[0].mxu0 %v416
        %v830 = vpop.f32.mrb[0].mxu0
        %v831 = vadd.f32 %v646, %v830
        %v832 = vpop.f32.mrb[0].mxu0
        %833 = vmatprep.mubr.f32.mxu0 0.0
        %834 = vmatmul.mubr.f32.gmra.mrb[0].mxu0 %v419
        %v835 = vpop.f32.mrb[0].mxu0
        %v836 = vadd.f32 %v651, %v835
        %v837 = vpop.f32.mrb[0].mxu0
        %838 = vmatprep.mubr.f32.mxu0 0.0
        %839 = vmatmul.mubr.f32.gmra.mrb[0].mxu0 %v422
        %v840 = vpop.f32.mrb[0].mxu0
        %v841 = vadd.f32 %v656, %v840
        %v842 = vpop.f32.mrb[0].mxu0
        %843 = vmatprep.mubr.f32.mxu0 0.0
        %844 = vmatmul.mubr.f32.gmra.mrb[0].mxu0 %v425
        %v845 = vpop.f32.mrb[0].mxu0
        %v846 = vadd.f32 %v661, %v845
        %v847 = vpop.f32.mrb[0].mxu0
        %848 = vmatprep.mubr.f32.mxu0 0.0
        %849 = vmatmul.mubr.f32.gmra.mrb[0].mxu0 %v428
        %v850 = vpop.f32.mrb[0].mxu0
        %v851 = vadd.f32 %v666, %v850
        %v852 = vpop.f32.mrb[0].mxu0
        %853 = vdwg.mxu0
        %v854 = vmax.f32 %v736, 0.0
        %v855 = vmax.f32 %v741, 0.0
        %v856 = vmax.f32 %v746, 0.0
        %v857 = vmax.f32 %v751, 0.0
        %v858 = vmax.f32 %v756, 0.0
        %v859 = vmax.f32 %v761, 0.0
        %v860 = vmax.f32 %v766, 0.0
        %v861 = vmax.f32 %v771, 0.0
        %v862 = vmax.f32 %v776, 0.0
        %v863 = vmax.f32 %v781, 0.0
        %v864 = vmax.f32 %v786, 0.0
        %v865 = vmax.f32 %v791, 0.0
        %v866 = vmax.f32 %v796, 0.0
        %v867 = vmax.f32 %v801, 0.0
        %v868 = vmax.f32 %v806, 0.0
        %v869 = vmax.f32 %v811, 0.0
        %v870 = vmax.f32 %v816, 0.0
        %v871 = vmax.f32 %v821, 0.0
        %v872 = vmax.f32 %v826, 0.0
        %v873 = vmax.f32 %v831, 0.0
        %v874 = vmax.f32 %v836, 0.0
        %v875 = vmax.f32 %v841, 0.0
        %v876 = vmax.f32 %v846, 0.0
        %v877 = vmax.f32 %v851, 0.0
        %v878 = vlaneseq
        %v879 = vshrl.u32 %v878, 7
        %v880 = vadd.s32 %v879, 8
        %v881 = vadd.s32 %v879, 16
        %vm882 = vcmp.lt.s32.totalorder %v879, 22
        %vm883 = vcmp.lt.s32.totalorder %v880, 22
        %vm884 = vcmp.lt.s32.totalorder %v881, 22
        %v885 = vsel %vm882, %v854, 0.0
        %v886 = vsel %vm883, %v855, 0.0
        %v887 = vsel %vm884, %v856, 0.0
        %v888 = vsel %vm882, %v857, 0.0
        %v889 = vsel %vm883, %v858, 0.0
        %v890 = vsel %vm884, %v859, 0.0
        %v891 = vsel %vm882, %v860, 0.0
        %v892 = vsel %vm883, %v861, 0.0
        %v893 = vsel %vm884, %v862, 0.0
        %v894 = vsel %vm882, %v863, 0.0
        %v895 = vsel %vm883, %v864, 0.0
        %v896 = vsel %vm884, %v865, 0.0
        %v897 = vsel %vm882, %v866, 0.0
        %v898 = vsel %vm883, %v867, 0.0
        %v899 = vsel %vm884, %v868, 0.0
        %v900 = vsel %vm882, %v869, 0.0
        %v901 = vsel %vm883, %v870, 0.0
        %v902 = vsel %vm884, %v871, 0.0
        %v903 = vsel %vm882, %v872, 0.0
        %v904 = vsel %vm883, %v873, 0.0
        %v905 = vsel %vm884, %v874, 0.0
        %v906 = vsel %vm882, %v875, 0.0
        %v907 = vsel %vm883, %v876, 0.0
        %v908 = vsel %vm884, %v877, 0.0
        %v909 = vmax.f32 %v885, %v886
        %v910 = vmax.f32 %v909, %v887
        %v911 = vrot.slane %v910, 4
        %v912 = vmax.f32 %v910, %v911
        %v913 = vrot.slane %v912, 2
        %v914 = vmax.f32 %v912, %v913
        %v915 = vrot.slane %v914, 1
        %v916 = vmax.f32 %v914, %v915
        %v917 = vmax.f32 %v888, %v889
        %v918 = vmax.f32 %v917, %v890
        %v919 = vrot.slane %v918, 4
        %v920 = vmax.f32 %v918, %v919
        %v921 = vrot.slane %v920, 2
        %v922 = vmax.f32 %v920, %v921
        %v923 = vrot.slane %v922, 1
        %v924 = vmax.f32 %v922, %v923
        %v925 = vmax.f32 %v891, %v892
        %v926 = vmax.f32 %v925, %v893
        %v927 = vrot.slane %v926, 4
        %v928 = vmax.f32 %v926, %v927
        %v929 = vrot.slane %v928, 2
        %v930 = vmax.f32 %v928, %v929
        %v931 = vrot.slane %v930, 1
        %v932 = vmax.f32 %v930, %v931
        %v933 = vmax.f32 %v894, %v895
        %v934 = vmax.f32 %v933, %v896
        %v935 = vrot.slane %v934, 4
        %v936 = vmax.f32 %v934, %v935
        %v937 = vrot.slane %v936, 2
        %v938 = vmax.f32 %v936, %v937
        %v939 = vrot.slane %v938, 1
        %v940 = vmax.f32 %v938, %v939
        %v941 = vmax.f32 %v897, %v898
        %v942 = vmax.f32 %v941, %v899
        %v943 = vrot.slane %v942, 4
        %v944 = vmax.f32 %v942, %v943
        %v945 = vrot.slane %v944, 2
        %v946 = vmax.f32 %v944, %v945
        %v947 = vrot.slane %v946, 1
        %v948 = vmax.f32 %v946, %v947
        %v949 = vmax.f32 %v900, %v901
        %v950 = vmax.f32 %v949, %v902
        %v951 = vrot.slane %v950, 4
        %v952 = vmax.f32 %v950, %v951
        %v953 = vrot.slane %v952, 2
        %v954 = vmax.f32 %v952, %v953
        %v955 = vrot.slane %v954, 1
        %v956 = vmax.f32 %v954, %v955
        %v957 = vmax.f32 %v903, %v904
        %v958 = vmax.f32 %v957, %v905
        %v959 = vrot.slane %v958, 4
        %v960 = vmax.f32 %v958, %v959
        %v961 = vrot.slane %v960, 2
        %v962 = vmax.f32 %v960, %v961
        %v963 = vrot.slane %v962, 1
        %v964 = vmax.f32 %v962, %v963
        %v965 = vmax.f32 %v906, %v907
        %v966 = vmax.f32 %v965, %v908
        %v967 = vrot.slane %v966, 4
        %v968 = vmax.f32 %v966, %v967
        %v969 = vrot.slane %v968, 2
        %v970 = vmax.f32 %v968, %v969
        %v971 = vrot.slane %v970, 1
        %v972 = vmax.f32 %v970, %v971
        %vm981 = vcmask 1041409
        %v982 = vsel %vm981, %v924, %v916
        %vm983 = vcmask 1042434
        %v984 = vsel %vm983, %v932, %v982
        %vm985 = vcmask 1043459
        %v986 = vsel %vm985, %v940, %v984
        %vm987 = vcmask 1044484
        %v988 = vsel %vm987, %v948, %v986
        %vm989 = vcmask 1045509
        %v990 = vsel %vm989, %v956, %v988
        %vm991 = vcmask 1046534
        %v992 = vsel %vm991, %v964, %v990
        %vm993 = vcmask 1047559
        %v994 = vsel %vm993, %v972, %v992
        %996 = vst [vmem:[%s204] sm:$0xff] %v994
        %s997 = sand.u32 %s97, 1
        %s998 = scalar_lea.sflag [#allocation5], %s997
        %s999 = sand.u32 %s97, 1
        %s1000 = smul.addr %s999, 8
        %s1001 = scalar_lea.vmem [#allocation8], %s1000
        // Predicated region
        $region41: #{tpu_custom_call.1} parent=31 // pred_check
          %p1002 = pneg %p107
        $region42: #{tpu_custom_call.1} parent=31 // pred_check_branch
          %1004 = sbr.rel (%p1002) target = $region44
        $region43: #{tpu_custom_call.1} parent=31 // pred_region
          %s1006 = ssub.s32 128, 128
          %1007 = vsyncadd %s998, %s1006
          %s1008 = smul.addr %s21, 128
          %s1009 = scalar_lea.hbm %s3, %s1008
          %s1011 = sshll.u32 %s1001, 4
          %s1012 = int_to_ptr.vmem [resolvable:$true] %s1011
          %1014 = dma.vmem_to_hbm [thread:$0]  %s1012, 128, %s1009, %s998
        $region44: #{tpu_custom_call.1} parent=31 // pred_fallthru
          _
      $region32: #{tpu_custom_call.1} parent=5 // pred_fallthru
        _
      %p1015 = scmp.le.s32.totalorder 2, %s16
      // Predicated region
      $region45: #{tpu_custom_call.1} parent=5 // pred_check
        %p1016 = pneg %p1015
      $region46: #{tpu_custom_call.1} parent=5 // pred_check_branch
        %1018 = sbr.rel (%p1016) target = $region48
      $region47: #{tpu_custom_call.1} parent=5 // pred_region
        %s1019 = ssub.s32 %s16, 2
        // Predicated region
        $region49: #{tpu_custom_call.1} parent=47 // pred_check
          %p1020 = pneg %p113
        $region50: #{tpu_custom_call.1} parent=47 // pred_check_branch
          %1022 = sbr.rel (%p1020) target = $region52
        $region51: #{tpu_custom_call.1} parent=47 // pred_region
          %s1023 = sand.u32 %s98, 1
          %s1024 = scalar_lea.sflag [#allocation5], %s1023
          %s1025 = sand.u32 %s98, 1
          %s1026 = smul.addr %s1025, 8
          %s1027 = scalar_lea.vmem [#allocation8], %s1026
          %1028 = dma.done %s1024, 128
        $region52: #{tpu_custom_call.1} parent=47 // pred_fallthru
          _
      $region48: #{tpu_custom_call.1} parent=5 // pred_fallthru
        _
    $region6: #{tpu_custom_call.1} parent=1 // loop_footer
      %s20 = sadd.s32 1, %s16
    $region7: #{tpu_custom_call.1} parent=1 // loop_footer_branch
      %15 = sbr.rel target = $region3
    $region8: #{tpu_custom_call.1} parent=1 // loop_exit
      _
    %1029 = vsyncpa [#allocation4], 1
    %s1030 = scalar_lea.sflag [#allocation4], 1
    %1031 = vsyncpa %s1030, 1
    %1032 = vsyncpa [#allocation7], 1
    %1033 = vsyncpa [#allocation5], 1
    %s1034 = scalar_lea.sflag [#allocation5], 1
    %1035 = vsyncpa %s1034, 1

</llo_original>
